<compile_context>
chip_gen: v5e
topology: v5e:2x2
jax: 0.10.0
libtpu: 0.0.40
codegen_flags: <defaults>
</compile_context>

<pallas_src>
import functools

import jax
import jax.numpy as jnp
from jax.experimental import pallas as pl
from jax.experimental.pallas import tpu as pltpu


def _round_up(a, b):
    return ((a + b - 1) // b) * b


def _choose_tiles(n, block_rows, block_k):
    """Row tile tm (sublane axis of the int8 adjacency, mult of 32), source tile tk
    (lane axis, mult of 128) and the padded node count.  Both are powers of two so the
    smaller divides the larger and a single round_up pads for both grid axes."""
    tm = max(32, min(pl.next_power_of_2(block_rows), pl.next_power_of_2(n)))
    tk = max(128, min(pl.next_power_of_2(block_k), pl.next_power_of_2(n)))
    np_ = _round_up(n, max(tm, tk))
    return tm, tk, np_


def build_gin_adjacency(edge_index, num_nodes, *, block_rows=512, block_k=512):
    """Dense (A + I) with A[dst,src] = #edges, as int8, padded to the kernel tiling.

    Built once per graph OUTSIDE the hot path (cache it keyed on edge_index) so the O(N^2)
    materialisation is not paid on every forward call.  int8 counts are exact for edge
    multiplicities <= 126.
    """
    _, _, np_ = _choose_tiles(num_nodes, block_rows, block_k)
    src, dst = edge_index[0], edge_index[1]
    adj = jnp.zeros((np_, np_), jnp.int32).at[dst, src].add(1)
    idx = jnp.arange(num_nodes)
    adj = adj.at[idx, idx].add(1)          # (1 + eps) * x_i folded in, eps = 0
    # TODO(synk): for very large sparse graphs the dense O(N^2) adjacency does not fit HBM;
    #             a CSR-style in-kernel gather (manual DMA over neighbor lists) is required.
    return adj.astype(jnp.int8)


# ---------------- Kernel 1: GINConv1 (aggregation + BN-folded MLP + outer ReLU) ----------------
def _conv1_kernel(adj_ref, x_ref, w1a_ref, b1a_ref, w1b_ref, b1b_ref, h_ref, acc_ref):
    # adj_ref : (tm, tk) int8   streamed (A + I) tile, upcast to bf16 at the dot
    # x_ref   : (tk, Fin) bf16  streamed source-node feature tile (cast hoisted to wrapper)
    # acc_ref : (tm, Fin) f32   aggregation accumulator (VMEM scratch)
    k = pl.program_id(1)

    @pl.when(k == 0)
    def _():
        acc_ref[...] = jnp.zeros_like(acc_ref)

    acc_ref[...] += jnp.dot(adj_ref[...].astype(jnp.bfloat16), x_ref[...],
                            preferred_element_type=jnp.float32)

    @pl.when(k == pl.num_programs(1) - 1)
    def _():
        # GIN MLP1: Linear (BN folded) -> ReLU -> Linear, then the outer F.relu.
        h = jnp.dot(acc_ref[...].astype(jnp.bfloat16), w1a_ref[...],
                    preferred_element_type=jnp.float32) + b1a_ref[...]
        h = jnp.maximum(h, 0.0)
        h = jnp.dot(h.astype(jnp.bfloat16), w1b_ref[...],
                    preferred_element_type=jnp.float32) + b1b_ref[...]
        h_ref[...] = jnp.maximum(h, 0.0).astype(h_ref.dtype)        # emitted as bf16


# ------ Kernel 2: GINConv2 + outer ReLU + head Linear(H,64)+ReLU (64->1 done in wrapper) ------
def _conv2_head_kernel(adj_ref, h_ref, w2a_ref, b2a_ref, w2b_ref, b2b_ref,
                       w3_ref, b3_ref, z_ref, acc_ref):
    k = pl.program_id(1)

    @pl.when(k == 0)
    def _():
        acc_ref[...] = jnp.zeros_like(acc_ref)

    acc_ref[...] += jnp.dot(adj_ref[...].astype(jnp.bfloat16), h_ref[...],
                            preferred_element_type=jnp.float32)

    @pl.when(k == pl.num_programs(1) - 1)
    def _():
        g = jnp.dot(acc_ref[...].astype(jnp.bfloat16), w2a_ref[...],
                    preferred_element_type=jnp.float32) + b2a_ref[...]
        g = jnp.maximum(g, 0.0)                                     # BN folded into w2a/b2a
        g = jnp.dot(g.astype(jnp.bfloat16), w2b_ref[...],
                    preferred_element_type=jnp.float32) + b2b_ref[...]
        g = jnp.maximum(g, 0.0)                                     # F.relu after conv2
        z = jnp.dot(g.astype(jnp.bfloat16), w3_ref[...],
                    preferred_element_type=jnp.float32) + b3_ref[...]
        z_ref[...] = jnp.maximum(z, 0.0).astype(z_ref.dtype)        # head ReLU; Dropout = id


def gin_net_forward(x, adj, params, *, block_rows=512, block_k=512):
    """x: (N, Fin) f32; adj: int8 (Np, Np) from build_gin_adjacency; params: dict."""
    n, fin = x.shape
    hid = params["w1b"].shape[0]
    hid_p = _round_up(hid, 128)        # lane-dense hidden width (unmasked stores)
    head_p = _round_up(64, 128)        # lane-dense head width
    tm, tk, np_ = _choose_tiles(n, block_rows, block_k)
    assert adj.shape == (np_, np_) and adj.dtype == jnp.int8, (adj.shape, adj.dtype)

    def pad2(a, rows, cols):
        return jnp.pad(a, ((0, rows - a.shape[0]), (0, cols - a.shape[1])))

    # Fold the eval-mode BatchNorm affine into the first Linear of each GIN MLP, zero-pad to
    # lane-dense widths (padded cols stay exactly zero through bias + ReLU), cast weights bf16.
    w1a = pad2(params["w1a"] * params["bn1_scale"], fin, hid_p).astype(jnp.bfloat16)
    b1a = pad2(params["b1a"] * params["bn1_scale"] + params["bn1_shift"], 1, hid_p)
    w1b = pad2(params["w1b"], hid_p, hid_p).astype(jnp.bfloat16)
    b1b = pad2(params["b1b"], 1, hid_p)
    w2a = pad2(params["w2a"] * params["bn2_scale"], hid_p, hid_p).astype(jnp.bfloat16)
    b2a = pad2(params["b2a"] * params["bn2_scale"] + params["bn2_shift"], 1, hid_p)
    w2b = pad2(params["w2b"], hid_p, hid_p).astype(jnp.bfloat16)
    b2b = pad2(params["b2b"], 1, hid_p)
    w3 = pad2(params["w3"], hid_p, head_p).astype(jnp.bfloat16)
    b3 = pad2(params["b3"], 1, head_p)

    # Aggregation operand already in bf16 (cast hoisted out of the kernel grid loop).
    x_pad = jnp.zeros((np_, fin), jnp.bfloat16).at[:n].set(x.astype(jnp.bfloat16))

    grid = (np_ // tm, np_ // tk)
    cparams = pltpu.CompilerParams(
        dimension_semantics=("parallel", "arbitrary"),   # rows megacore-parallel, k = reduction
    )

    def const(shape):
        return pl.BlockSpec(shape, lambda i, k: (0, 0))

    adj_spec = pl.BlockSpec((tm, tk), lambda i, k: (i, k))

    # ---- GINConv1 (+ outer ReLU); emits bf16 so conv2 re-reads half the bytes ----
    h = pl.pallas_call(
        _conv1_kernel,
        out_shape=jax.ShapeDtypeStruct((np_, hid_p), jnp.bfloat16),
        grid=grid,
        in_specs=[
            adj_spec,
            pl.BlockSpec((tk, fin), lambda i, k: (k, 0)),
            const((fin, hid_p)), const((1, hid_p)),
            const((hid_p, hid_p)), const((1, hid_p)),
        ],
        out_specs=pl.BlockSpec((tm, hid_p), lambda i, k: (i, 0)),
        scratch_shapes=[pltpu.VMEM((tm, fin), jnp.float32)],
        compiler_params=cparams,
    )(adj, x_pad, w1a, b1a, w1b, b1b)

    # NOTE: padded node rows of h hold bias/ReLU garbage, but their adjacency *columns* are
    # zero so they never contribute to real rows; the final output is sliced to [:n] below.

    # ---- GINConv2 (+ outer ReLU) fused with head Linear(H,64) + ReLU ----
    z = pl.pallas_call(
        _conv2_head_kernel,
        out_shape=jax.ShapeDtypeStruct((np_, head_p), jnp.float32),
        grid=grid,
        in_specs=[
            adj_spec,
            pl.BlockSpec((tk, hid_p), lambda i, k: (k, 0)),
            const((hid_p, hid_p)), const((1, hid_p)),
            const((hid_p, hid_p)), const((1, hid_p)),
            const((hid_p, head_p)), const((1, head_p)),
        ],
        out_specs=pl.BlockSpec((tm, head_p), lambda i, k: (i, 0)),
        scratch_shapes=[pltpu.VMEM((tm, hid_p), jnp.float32)],
        compiler_params=cparams,
    )(adj, h, w2a, b2a, w2b, b2b, w3, b3)

    # Lane-dense epilogue: trailing Linear(64, 1) + squeeze on the unpadded rows.
    out = z[:n, :64] @ params["w4"] + params["b4"]       # (n, 1)
    return jnp.squeeze(out, axis=-1)                     # torch .squeeze() -> (n,)


def init_params(key, in_channels, hidden_channels):
    ks = jax.random.split(key, 6)

    def lin(k, fan_in, fan_out):
        bound = 1.0 / jnp.sqrt(fan_in)
        kw, kb = jax.random.split(k)
        w = jax.random.uniform(kw, (fan_in, fan_out), jnp.float32, -bound, bound)
        b = jax.random.uniform(kb, (1, fan_out), jnp.float32, -bound, bound)
        return w, b

    h = hidden_channels
    p = {}
    # GINConv1 MLP: Linear(Fin,H) -> BN(H) -> ReLU -> Linear(H,H)
    p["w1a"], p["b1a"] = lin(ks[0], in_channels, h)
    p["w1b"], p["b1b"] = lin(ks[1], h, h)
    # GINConv2 MLP: Linear(H,H) -> BN(H) -> ReLU -> Linear(H,H)
    p["w2a"], p["b2a"] = lin(ks[2], h, h)
    p["w2b"], p["b2b"] = lin(ks[3], h, h)
    # Head: Linear(H,64) -> ReLU -> Dropout -> Linear(64,1)
    p["w3"], p["b3"] = lin(ks[4], h, 64)
    p["w4"], p["b4"] = lin(ks[5], 64, 1)

    # BatchNorm1d eval-mode params as a per-channel affine:
    # scale = gamma / sqrt(running_var + eps), shift = beta - running_mean * scale
    eps = 1e-5
    for name in ("bn1", "bn2"):
        gamma = jnp.ones((1, h), jnp.float32)
        beta = jnp.zeros((1, h), jnp.float32)
        run_mean = jnp.zeros((1, h), jnp.float32)
        run_var = jnp.ones((1, h), jnp.float32)
        scale = gamma / jnp.sqrt(run_var + eps)
        p[f"{name}_scale"] = scale
        p[f"{name}_shift"] = beta - run_mean * scale
    return p


def _reference_forward(x, edge_index, params):
    """Pure-JAX f32 reference for a sanity check."""
    n = x.shape[0]
    adj = jnp.zeros((n, n), jnp.float32).at[edge_index[1], edge_index[0]].add(1.0)

    def gin_mlp(v, wa, ba, s, sh, wb, bb):
        v = v @ wa + ba
        v = v * s + sh
        v = jnp.maximum(v, 0.0)
        return v @ wb + bb

    h = gin_mlp(x + adj @ x, params["w1a"], params["b1a"], params["bn1_scale"],
                params["bn1_shift"], params["w1b"], params["b1b"])
    h = jnp.maximum(h, 0.0)
    g = gin_mlp(h + adj @ h, params["w2a"], params["b2a"], params["bn2_scale"],
                params["bn2_shift"], params["w2b"], params["b2b"])
    g = jnp.maximum(g, 0.0)
    z = jnp.maximum(g @ params["w3"] + params["b3"], 0.0)
    return jnp.squeeze(z @ params["w4"] + params["b4"], axis=-1)


if __name__ == "__main__":
    key = jax.random.PRNGKey(0)
    k_x, k_src, k_dst, k_p = jax.random.split(key, 4)

    N, FIN, HID, E = 200, 8, 32, 600
    x = jax.random.normal(k_x, (N, FIN), jnp.float32)
    src = jax.random.randint(k_src, (E,), 0, N, jnp.int32)
    dst = jax.random.randint(k_dst, (E,), 0, N, jnp.int32)
    edge_index = jnp.stack([src, dst], axis=0)            # (2, E), row0 = src, row1 = dst

    params = init_params(k_p, FIN, HID)

    # Small tiles so the test exercises several row blocks AND several k-accumulation steps
    # (tm=32, tk=128, padded N=256 -> grid (8, 2)).  Production default: 512 / 512.
    tile_kw = dict(block_rows=32, block_k=128)
    adj = build_gin_adjacency(edge_index, N, **tile_kw)    # built once, outside the hot path

    fwd = jax.jit(functools.partial(gin_net_forward, **tile_kw))
    out = fwd(x, adj, params)
    jax.block_until_ready(out)
    assert out.shape == (N,), out.shape

    ref = _reference_forward(x, edge_index, params)
    # bf16 adjacency/feature/weight operands (f32 accumulation) -> loose tolerance, inference-ok.
    assert jnp.allclose(out, ref, rtol=1e-1, atol=1e-1), float(jnp.max(jnp.abs(out - ref)))

    print("KERNEL_OK")
</pallas_src>

<mosaic_0001>
module attributes {stable_mosaic.version = 11 : i64} {
  func.func @_conv1_kernel(%arg0: i32, %arg1: i32, %arg2: memref<32x128xi8, #tpu.memory_space<vmem>>, %arg3: memref<128x8xbf16, #tpu.memory_space<vmem>>, %arg4: memref<8x128xbf16, #tpu.memory_space<vmem>>, %arg5: memref<1x128xf32, #tpu.memory_space<vmem>>, %arg6: memref<128x128xbf16, #tpu.memory_space<vmem>>, %arg7: memref<1x128xf32, #tpu.memory_space<vmem>>, %arg8: memref<32x128xbf16, #tpu.memory_space<vmem>>, %arg9: memref<32x8xf32, #tpu.memory_space<vmem>>) attributes {dimension_semantics = [#tpu.dimension_semantics<parallel>, #tpu.dimension_semantics<arbitrary>], iteration_bounds = array<i64: 8, 2>, scalar_prefetch = 0 : i64, scratch_operands = 1 : i64, tpu.core_type = #tpu.core_type<tc>, window_params = [{transform_indices = @transform_0, window_bounds = array<i64: 32, 128>}, {transform_indices = @transform_1, window_bounds = array<i64: 128, 8>}, {pipeline_mode = #tpu.pipeline_mode<synchronous>, transform_indices = @transform_2, window_bounds = array<i64: 8, 128>}, {pipeline_mode = #tpu.pipeline_mode<synchronous>, transform_indices = @transform_3, window_bounds = array<i64: 1, 128>}, {pipeline_mode = #tpu.pipeline_mode<synchronous>, transform_indices = @transform_4, window_bounds = array<i64: 128, 128>}, {pipeline_mode = #tpu.pipeline_mode<synchronous>, transform_indices = @transform_5, window_bounds = array<i64: 1, 128>}, {transform_indices = @transform_6, window_bounds = array<i64: 32, 128>}]} {
    %c0_i32 = arith.constant 0 : i32
    %0 = arith.cmpi eq, %arg1, %c0_i32 : i32
    %1 = arith.extui %0 : i1 to i32
    %c0_i32_0 = arith.constant 0 : i32
    %2 = arith.cmpi ne, %1, %c0_i32_0 : i32
    scf.if %2 {
      %cst_9 = arith.constant 0.000000e+00 : f32
      %13 = vector.broadcast %cst_9 : f32 to vector<32x8xf32>
      %c0_10 = arith.constant 0 : index
      %c0_11 = arith.constant 0 : index
      %14 = vector.load %arg9[%c0_10, %c0_11] : memref<32x8xf32, #tpu.memory_space<vmem>>, vector<32x8xf32>
      tpu.vector_store %arg9[%c0_10, %c0_11], %13 {strides = array<i32>} : memref<32x8xf32, #tpu.memory_space<vmem>>, vector<32x8xf32>,
    } else {
    }
    %c0 = arith.constant 0 : index
    %c0_1 = arith.constant 0 : index
    %3 = vector.load %arg9[%c0, %c0_1] : memref<32x8xf32, #tpu.memory_space<vmem>>, vector<32x8xf32>
    %c0_2 = arith.constant 0 : index
    %c0_3 = arith.constant 0 : index
    %4 = vector.load %arg2[%c0_2, %c0_3] : memref<32x128xi8, #tpu.memory_space<vmem>>, vector<32x128xi8>
    %5 = arith.sitofp %4 : vector<32x128xi8> to vector<32x128xbf16>
    %c0_4 = arith.constant 0 : index
    %c0_5 = arith.constant 0 : index
    %6 = vector.load %arg3[%c0_4, %c0_5] : memref<128x8xbf16, #tpu.memory_space<vmem>>, vector<128x8xbf16>
    %cst = arith.constant dense<0.000000e+00> : vector<32x8xf32>
    %7 = tpu.matmul %5, %6, %cst {dimension_numbers = #tpu.dot_dimension_numbers<[1], [0], [0], [1], [0, 0, 1, 1], [], []>} : vector<32x128xbf16>, vector<128x8xbf16>, vector<32x8xf32> -> vector<32x8xf32>
    %8 = arith.addf %3, %7 : vector<32x8xf32>
    %c0_6 = arith.constant 0 : index
    %c0_7 = arith.constant 0 : index
    %9 = vector.load %arg9[%c0_6, %c0_7] : memref<32x8xf32, #tpu.memory_space<vmem>>, vector<32x8xf32>
    tpu.vector_store %arg9[%c0_6, %c0_7], %8 {strides = array<i32>} : memref<32x8xf32, #tpu.memory_space<vmem>>, vector<32x8xf32>,
    %c1_i32 = arith.constant 1 : i32
    %10 = arith.cmpi eq, %arg1, %c1_i32 : i32
    %11 = arith.extui %10 : i1 to i32
    %c0_i32_8 = arith.constant 0 : i32
    %12 = arith.cmpi ne, %11, %c0_i32_8 : i32
    scf.if %12 {
      %c0_9 = arith.constant 0 : index
      %c0_10 = arith.constant 0 : index
      %13 = vector.load %arg9[%c0_9, %c0_10] : memref<32x8xf32, #tpu.memory_space<vmem>>, vector<32x8xf32>
      %14 = arith.truncf %13 : vector<32x8xf32> to vector<32x8xbf16>
      %c0_11 = arith.constant 0 : index
      %c0_12 = arith.constant 0 : index
      %15 = vector.load %arg4[%c0_11, %c0_12] : memref<8x128xbf16, #tpu.memory_space<vmem>>, vector<8x128xbf16>
      %cst_13 = arith.constant dense<0.000000e+00> : vector<32x128xf32>
      %16 = tpu.matmul %14, %15, %cst_13 {dimension_numbers = #tpu.dot_dimension_numbers<[1], [0], [0], [1], [0, 0, 1, 1], [], []>} : vector<32x8xbf16>, vector<8x128xbf16>, vector<32x128xf32> -> vector<32x128xf32>
      %c0_14 = arith.constant 0 : index
      %c0_15 = arith.constant 0 : index
      %17 = vector.load %arg5[%c0_14, %c0_15] : memref<1x128xf32, #tpu.memory_space<vmem>>, vector<1x128xf32>
      %18 = vector.broadcast %17 : vector<1x128xf32> to vector<32x128xf32>
      %19 = arith.addf %16, %18 : vector<32x128xf32>
      %cst_16 = arith.constant 0.000000e+00 : f32
      %20 = vector.broadcast %cst_16 : f32 to vector<32x128xf32>
      %21 = arith.maximumf %19, %20 : vector<32x128xf32>
      %22 = arith.truncf %21 : vector<32x128xf32> to vector<32x128xbf16>
      %c0_17 = arith.constant 0 : index
      %c0_18 = arith.constant 0 : index
      %23 = vector.load %arg6[%c0_17, %c0_18] : memref<128x128xbf16, #tpu.memory_space<vmem>>, vector<128x128xbf16>
      %cst_19 = arith.constant dense<0.000000e+00> : vector<32x128xf32>
      %24 = tpu.matmul %22, %23, %cst_19 {dimension_numbers = #tpu.dot_dimension_numbers<[1], [0], [0], [1], [0, 0, 1, 1], [], []>} : vector<32x128xbf16>, vector<128x128xbf16>, vector<32x128xf32> -> vector<32x128xf32>
      %c0_20 = arith.constant 0 : index
      %c0_21 = arith.constant 0 : index
      %25 = vector.load %arg7[%c0_20, %c0_21] : memref<1x128xf32, #tpu.memory_space<vmem>>, vector<1x128xf32>
      %26 = vector.broadcast %25 : vector<1x128xf32> to vector<32x128xf32>
      %27 = arith.addf %24, %26 : vector<32x128xf32>
      %cst_22 = arith.constant 0.000000e+00 : f32
      %28 = vector.broadcast %cst_22 : f32 to vector<32x128xf32>
      %29 = arith.maximumf %27, %28 : vector<32x128xf32>
      %30 = arith.truncf %29 : vector<32x128xf32> to vector<32x128xbf16>
      %c0_23 = arith.constant 0 : index
      %c0_24 = arith.constant 0 : index
      %31 = vector.load %arg8[%c0_23, %c0_24] : memref<32x128xbf16, #tpu.memory_space<vmem>>, vector<32x128xbf16>
      tpu.vector_store %arg8[%c0_23, %c0_24], %30 {strides = array<i32>} : memref<32x128xbf16, #tpu.memory_space<vmem>>, vector<32x128xbf16>,
    } else {
    }
    return
  }
  func.func @transform_0(%arg0: i32, %arg1: i32) -> (i32, i32) {
    %c0_i32 = arith.constant 0 : i32
    return %arg0, %arg1 : i32, i32
  }
  func.func @transform_1(%arg0: i32, %arg1: i32) -> (i32, i32) {
    %c0_i32 = arith.constant 0 : i32
    %c0_i32_0 = arith.constant 0 : i32
    return %arg1, %c0_i32 : i32, i32
  }
  func.func @transform_2(%arg0: i32, %arg1: i32) -> (i32, i32) {
    %c0_i32 = arith.constant 0 : i32
    %c0_i32_0 = arith.constant 0 : i32
    %c0_i32_1 = arith.constant 0 : i32
    return %c0_i32, %c0_i32_0 : i32, i32
  }
  func.func @transform_3(%arg0: i32, %arg1: i32) -> (i32, i32) {
    %c0_i32 = arith.constant 0 : i32
    %c0_i32_0 = arith.constant 0 : i32
    %c0_i32_1 = arith.constant 0 : i32
    return %c0_i32, %c0_i32_0 : i32, i32
  }
  func.func @transform_4(%arg0: i32, %arg1: i32) -> (i32, i32) {
    %c0_i32 = arith.constant 0 : i32
    %c0_i32_0 = arith.constant 0 : i32
    %c0_i32_1 = arith.constant 0 : i32
    return %c0_i32, %c0_i32_0 : i32, i32
  }
  func.func @transform_5(%arg0: i32, %arg1: i32) -> (i32, i32) {
    %c0_i32 = arith.constant 0 : i32
    %c0_i32_0 = arith.constant 0 : i32
    %c0_i32_1 = arith.constant 0 : i32
    return %c0_i32, %c0_i32_0 : i32, i32
  }
  func.func @transform_6(%arg0: i32, %arg1: i32) -> (i32, i32) {
    %c0_i32 = arith.constant 0 : i32
    %c0_i32_0 = arith.constant 0 : i32
    return %arg0, %c0_i32 : i32, i32
  }
}

module attributes {stable_mosaic.version = 11 : i64} {
  func.func @_conv2_head_kernel(%arg0: i32, %arg1: i32, %arg2: memref<32x128xi8, #tpu.memory_space<vmem>>, %arg3: memref<128x128xbf16, #tpu.memory_space<vmem>>, %arg4: memref<128x128xbf16, #tpu.memory_space<vmem>>, %arg5: memref<1x128xf32, #tpu.memory_space<vmem>>, %arg6: memref<128x128xbf16, #tpu.memory_space<vmem>>, %arg7: memref<1x128xf32, #tpu.memory_space<vmem>>, %arg8: memref<128x128xbf16, #tpu.memory_space<vmem>>, %arg9: memref<1x128xf32, #tpu.memory_space<vmem>>, %arg10: memref<32x128xf32, #tpu.memory_space<vmem>>, %arg11: memref<32x128xf32, #tpu.memory_space<vmem>>) attributes {dimension_semantics = [#tpu.dimension_semantics<parallel>, #tpu.dimension_semantics<arbitrary>], iteration_bounds = array<i64: 8, 2>, scalar_prefetch = 0 : i64, scratch_operands = 1 : i64, tpu.core_type = #tpu.core_type<tc>, window_params = [{transform_indices = @transform_0, window_bounds = array<i64: 32, 128>}, {transform_indices = @transform_1, window_bounds = array<i64: 128, 128>}, {pipeline_mode = #tpu.pipeline_mode<synchronous>, transform_indices = @transform_2, window_bounds = array<i64: 128, 128>}, {pipeline_mode = #tpu.pipeline_mode<synchronous>, transform_indices = @transform_3, window_bounds = array<i64: 1, 128>}, {pipeline_mode = #tpu.pipeline_mode<synchronous>, transform_indices = @transform_4, window_bounds = array<i64: 128, 128>}, {pipeline_mode = #tpu.pipeline_mode<synchronous>, transform_indices = @transform_5, window_bounds = array<i64: 1, 128>}, {pipeline_mode = #tpu.pipeline_mode<synchronous>, transform_indices = @transform_6, window_bounds = array<i64: 128, 128>}, {pipeline_mode = #tpu.pipeline_mode<synchronous>, transform_indices = @transform_7, window_bounds = array<i64: 1, 128>}, {transform_indices = @transform_8, window_bounds = array<i64: 32, 128>}]} {
    %c0_i32 = arith.constant 0 : i32
    %0 = arith.cmpi eq, %arg1, %c0_i32 : i32
    %1 = arith.extui %0 : i1 to i32
    %c0_i32_0 = arith.constant 0 : i32
    %2 = arith.cmpi ne, %1, %c0_i32_0 : i32
    scf.if %2 {
      %cst_9 = arith.constant 0.000000e+00 : f32
      %13 = vector.broadcast %cst_9 : f32 to vector<32x128xf32>
      %c0_10 = arith.constant 0 : index
      %c0_11 = arith.constant 0 : index
      %14 = vector.load %arg11[%c0_10, %c0_11] : memref<32x128xf32, #tpu.memory_space<vmem>>, vector<32x128xf32>
      tpu.vector_store %arg11[%c0_10, %c0_11], %13 {strides = array<i32>} : memref<32x128xf32, #tpu.memory_space<vmem>>, vector<32x128xf32>,
    } else {
    }
    %c0 = arith.constant 0 : index
    %c0_1 = arith.constant 0 : index
    %3 = vector.load %arg11[%c0, %c0_1] : memref<32x128xf32, #tpu.memory_space<vmem>>, vector<32x128xf32>
    %c0_2 = arith.constant 0 : index
    %c0_3 = arith.constant 0 : index
    %4 = vector.load %arg2[%c0_2, %c0_3] : memref<32x128xi8, #tpu.memory_space<vmem>>, vector<32x128xi8>
    %5 = arith.sitofp %4 : vector<32x128xi8> to vector<32x128xbf16>
    %c0_4 = arith.constant 0 : index
    %c0_5 = arith.constant 0 : index
    %6 = vector.load %arg3[%c0_4, %c0_5] : memref<128x128xbf16, #tpu.memory_space<vmem>>, vector<128x128xbf16>
    %cst = arith.constant dense<0.000000e+00> : vector<32x128xf32>
    %7 = tpu.matmul %5, %6, %cst {dimension_numbers = #tpu.dot_dimension_numbers<[1], [0], [0], [1], [0, 0, 1, 1], [], []>} : vector<32x128xbf16>, vector<128x128xbf16>, vector<32x128xf32> -> vector<32x128xf32>
    %8 = arith.addf %3, %7 : vector<32x128xf32>
    %c0_6 = arith.constant 0 : index
    %c0_7 = arith.constant 0 : index
    %9 = vector.load %arg11[%c0_6, %c0_7] : memref<32x128xf32, #tpu.memory_space<vmem>>, vector<32x128xf32>
    tpu.vector_store %arg11[%c0_6, %c0_7], %8 {strides = array<i32>} : memref<32x128xf32, #tpu.memory_space<vmem>>, vector<32x128xf32>,
    %c1_i32 = arith.constant 1 : i32
    %10 = arith.cmpi eq, %arg1, %c1_i32 : i32
    %11 = arith.extui %10 : i1 to i32
    %c0_i32_8 = arith.constant 0 : i32
    %12 = arith.cmpi ne, %11, %c0_i32_8 : i32
    scf.if %12 {
      %c0_9 = arith.constant 0 : index
      %c0_10 = arith.constant 0 : index
      %13 = vector.load %arg11[%c0_9, %c0_10] : memref<32x128xf32, #tpu.memory_space<vmem>>, vector<32x128xf32>
      %14 = arith.truncf %13 : vector<32x128xf32> to vector<32x128xbf16>
      %c0_11 = arith.constant 0 : index
      %c0_12 = arith.constant 0 : index
      %15 = vector.load %arg4[%c0_11, %c0_12] : memref<128x128xbf16, #tpu.memory_space<vmem>>, vector<128x128xbf16>
      %cst_13 = arith.constant dense<0.000000e+00> : vector<32x128xf32>
      %16 = tpu.matmul %14, %15, %cst_13 {dimension_numbers = #tpu.dot_dimension_numbers<[1], [0], [0], [1], [0, 0, 1, 1], [], []>} : vector<32x128xbf16>, vector<128x128xbf16>, vector<32x128xf32> -> vector<32x128xf32>
      %c0_14 = arith.constant 0 : index
      %c0_15 = arith.constant 0 : index
      %17 = vector.load %arg5[%c0_14, %c0_15] : memref<1x128xf32, #tpu.memory_space<vmem>>, vector<1x128xf32>
      %18 = vector.broadcast %17 : vector<1x128xf32> to vector<32x128xf32>
      %19 = arith.addf %16, %18 : vector<32x128xf32>
      %cst_16 = arith.constant 0.000000e+00 : f32
      %20 = vector.broadcast %cst_16 : f32 to vector<32x128xf32>
      %21 = arith.maximumf %19, %20 : vector<32x128xf32>
      %22 = arith.truncf %21 : vector<32x128xf32> to vector<32x128xbf16>
      %c0_17 = arith.constant 0 : index
      %c0_18 = arith.constant 0 : index
      %23 = vector.load %arg6[%c0_17, %c0_18] : memref<128x128xbf16, #tpu.memory_space<vmem>>, vector<128x128xbf16>
      %cst_19 = arith.constant dense<0.000000e+00> : vector<32x128xf32>
      %24 = tpu.matmul %22, %23, %cst_19 {dimension_numbers = #tpu.dot_dimension_numbers<[1], [0], [0], [1], [0, 0, 1, 1], [], []>} : vector<32x128xbf16>, vector<128x128xbf16>, vector<32x128xf32> -> vector<32x128xf32>
      %c0_20 = arith.constant 0 : index
      %c0_21 = arith.constant 0 : index
      %25 = vector.load %arg7[%c0_20, %c0_21] : memref<1x128xf32, #tpu.memory_space<vmem>>, vector<1x128xf32>
      %26 = vector.broadcast %25 : vector<1x128xf32> to vector<32x128xf32>
      %27 = arith.addf %24, %26 : vector<32x128xf32>
      %cst_22 = arith.constant 0.000000e+00 : f32
      %28 = vector.broadcast %cst_22 : f32 to vector<32x128xf32>
      %29 = arith.maximumf %27, %28 : vector<32x128xf32>
      %30 = arith.truncf %29 : vector<32x128xf32> to vector<32x128xbf16>
      %c0_23 = arith.constant 0 : index
      %c0_24 = arith.constant 0 : index
      %31 = vector.load %arg8[%c0_23, %c0_24] : memref<128x128xbf16, #tpu.memory_space<vmem>>, vector<128x128xbf16>
      %cst_25 = arith.constant dense<0.000000e+00> : vector<32x128xf32>
      %32 = tpu.matmul %30, %31, %cst_25 {dimension_numbers = #tpu.dot_dimension_numbers<[1], [0], [0], [1], [0, 0, 1, 1], [], []>} : vector<32x128xbf16>, vector<128x128xbf16>, vector<32x128xf32> -> vector<32x128xf32>
      %c0_26 = arith.constant 0 : index
      %c0_27 = arith.constant 0 : index
      %33 = vector.load %arg9[%c0_26, %c0_27] : memref<1x128xf32, #tpu.memory_space<vmem>>, vector<1x128xf32>
      %34 = vector.broadcast %33 : vector<1x128xf32> to vector<32x128xf32>
      %35 = arith.addf %32, %34 : vector<32x128xf32>
      %cst_28 = arith.constant 0.000000e+00 : f32
      %36 = vector.broadcast %cst_28 : f32 to vector<32x128xf32>
      %37 = arith.maximumf %35, %36 : vector<32x128xf32>
      %c0_29 = arith.constant 0 : index
      %c0_30 = arith.constant 0 : index
      %38 = vector.load %arg10[%c0_29, %c0_30] : memref<32x128xf32, #tpu.memory_space<vmem>>, vector<32x128xf32>
      tpu.vector_store %arg10[%c0_29, %c0_30], %37 {strides = array<i32>} : memref<32x128xf32, #tpu.memory_space<vmem>>, vector<32x128xf32>,
    } else {
    }
    return
  }
  func.func @transform_0(%arg0: i32, %arg1: i32) -> (i32, i32) {
    %c0_i32 = arith.constant 0 : i32
    return %arg0, %arg1 : i32, i32
  }
  func.func @transform_1(%arg0: i32, %arg1: i32) -> (i32, i32) {
    %c0_i32 = arith.constant 0 : i32
    %c0_i32_0 = arith.constant 0 : i32
    return %arg1, %c0_i32 : i32, i32
  }
  func.func @transform_2(%arg0: i32, %arg1: i32) -> (i32, i32) {
    %c0_i32 = arith.constant 0 : i32
    %c0_i32_0 = arith.constant 0 : i32
    %c0_i32_1 = arith.constant 0 : i32
    return %c0_i32, %c0_i32_0 : i32, i32
  }
  func.func @transform_3(%arg0: i32, %arg1: i32) -> (i32, i32) {
    %c0_i32 = arith.constant 0 : i32
    %c0_i32_0 = arith.constant 0 : i32
    %c0_i32_1 = arith.constant 0 : i32
    return %c0_i32, %c0_i32_0 : i32, i32
  }
  func.func @transform_4(%arg0: i32, %arg1: i32) -> (i32, i32) {
    %c0_i32 = arith.constant 0 : i32
    %c0_i32_0 = arith.constant 0 : i32
    %c0_i32_1 = arith.constant 0 : i32
    return %c0_i32, %c0_i32_0 : i32, i32
  }
  func.func @transform_5(%arg0: i32, %arg1: i32) -> (i32, i32) {
    %c0_i32 = arith.constant 0 : i32
    %c0_i32_0 = arith.constant 0 : i32
    %c0_i32_1 = arith.constant 0 : i32
    return %c0_i32, %c0_i32_0 : i32, i32
  }
  func.func @transform_6(%arg0: i32, %arg1: i32) -> (i32, i32) {
    %c0_i32 = arith.constant 0 : i32
    %c0_i32_0 = arith.constant 0 : i32
    %c0_i32_1 = arith.constant 0 : i32
    return %c0_i32, %c0_i32_0 : i32, i32
  }
  func.func @transform_7(%arg0: i32, %arg1: i32) -> (i32, i32) {
    %c0_i32 = arith.constant 0 : i32
    %c0_i32_0 = arith.constant 0 : i32
    %c0_i32_1 = arith.constant 0 : i32
    return %c0_i32, %c0_i32_0 : i32, i32
  }
  func.func @transform_8(%arg0: i32, %arg1: i32) -> (i32, i32) {
    %c0_i32 = arith.constant 0 : i32
    %c0_i32_0 = arith.constant 0 : i32
    return %arg0, %c0_i32 : i32, i32
  }
}

</mosaic_0001>

<llo_original>
// kernel: gin_net_forward.2
$region0: #{gin_net_forward.2}
  #allocation0 [shape = 'u32[]', space=smem, size = 0x4, offset = 0x4, fixed_abs, tag = 'smem constant byte address 0x4 - core index']
  #allocation1 [shape = 'u32[72,128]{1,0:T(1,128)}', space=vmem, size = 0x9000, scoped, tag = 'internal scratch']
  #allocation2 [shape = 'f32[32,8]{1,0:T(8,128)}', space=vmem, size = 0x4000, scoped, tag = 'scratch operand']
  %s0 = inlined_call_operand.vmem [shape: s8[256,256], index: 0, kind: input, shape index: {}]
  %s1 = inlined_call_operand.vmem [shape: bf16[256,8], index: 1, kind: input, shape index: {}]
  %s2 = inlined_call_operand.vmem [shape: bf16[8,128], index: 2, kind: input, shape index: {}]
  %s3 = inlined_call_operand.vmem [shape: f32[1,128], index: 3, kind: input, shape index: {}]
  %s4 = inlined_call_operand.vmem [shape: bf16[128,128], index: 4, kind: input, shape index: {}]
  %s5 = inlined_call_operand.vmem [shape: f32[1,128], index: 5, kind: input, shape index: {}]
  %s6 = inlined_call_operand.vmem [shape: bf16[256,128], index: 6, kind: output, shape index: {}]
  %s7 = sld [smem:[#allocation0]]
  $region65: #{gin_net_forward.2} parent=0
    _
  %s9 = ssub.s32 1, %s7
  %s10 = scalar_select 0, %s9, %s7
  loop: start=0, step=1, limit=18
  $region2: #{gin_net_forward.2} parent=0 // loop_pre_header
    _
  $region3: #{gin_net_forward.2} parent=0 // loop_header
    %s12 = sphi 0, %s16
    %p13 = scmp.ge.s32.totalorder %s12, 18
    %s19 = sphi 0, %s31
    %s20 = sphi 0, %s27
    %s21 = sphi 0, %s19
    %s22 = sphi 0, %s20
    %s23 = sphi 0, %s21
    %s24 = sphi 0, %s22
    %s36 = sphi 0, %s38
    %s39 = sphi 0, %s36
    %s40 = sphi 0, %s39
    %s56 = sphi 0, %s40
    %s62 = sphi 0, %s64
    %s65 = sphi 0, %s62
    %s66 = sphi 0, %s65
    %s82 = sphi 0, %s66
    %s86 = sphi 0, %s86
    %s88 = sphi 0, %s86
    %s89 = sphi 0, %s88
    %s103 = sphi 0, %s89
    %s107 = sphi 0, %s107
    %s109 = sphi 0, %s107
    %s110 = sphi 0, %s109
    %s124 = sphi 0, %s110
    %s128 = sphi 0, %s128
    %s130 = sphi 0, %s128
    %s131 = sphi 0, %s130
    %s145 = sphi 0, %s131
    %s149 = sphi 0, %s149
    %s151 = sphi 0, %s149
    %s152 = sphi 0, %s151
    %s166 = sphi 0, %s152
    %s172 = sphi 0, %s174
    %s175 = sphi 0, %s172
    %s176 = sphi 0, %s175
    %s192 = sphi 0, %s176
  $region4: #{gin_net_forward.2} parent=0 // loop_header_branch
    %15 = sbr.rel (%p13) target = $region8
  $region5: #{gin_net_forward.2} parent=0 // loop_body
    %s17 = ssub.s32 %s12, 1
    %s18 = ssub.s32 %s12, 2
    %s25 = sadd.s32 1, %s20
    %p26 = scmp.ge.s32.totalorder %s25, 2
    %s27 = scalar_select %p26, 0, %s25
    %s28 = sadd.s32 1, %s19
    %s29 = scalar_select %p26, %s28, %s19
    %p30 = scmp.ge.s32.totalorder %s29, 8
    %s31 = scalar_select %p30, 0, %s29
    %s32 = ssub.s32 %s19, %s31
    %s33 = ssub.s32 %s20, %s27
    %s34 = sor.u32 %s32, %s33
    %p35 = scmp.eq.s32.totalorder %s34, 0
    %s37 = sadd.s32 %s36, 1
    %s38 = scalar_select %p35, %s36, %s37
    %p41 = pneg %p35
    %p42 = scmp.eq.s32.totalorder %s12, 15
    %p43 = por %p41, %p42
    %p44 = scmp.ne.s32.totalorder %s36, %s39
    %p45 = scmp.eq.s32.totalorder %s12, 0
    %p46 = por %p44, %p45
    %p47 = scmp.ne.s32.totalorder %s36, %s39
    %p48 = scmp.eq.s32.totalorder %s17, 15
    %p49 = por %p47, %p48
    %p50 = scmp.ne.s32.totalorder %s39, %s40
    %p51 = scmp.eq.s32.totalorder %s17, 0
    %p52 = por %p50, %p51
    %p53 = scmp.ne.s32.totalorder %s39, %s40
    %p54 = scmp.eq.s32.totalorder %s18, 15
    %p55 = por %p53, %p54
    %p57 = scmp.ne.s32.totalorder %s40, %s56
    %p58 = scmp.eq.s32.totalorder %s18, 0
    %p59 = por %p57, %p58
    %s60 = ssub.s32 %s20, %s27
    %p61 = scmp.eq.s32.totalorder %s60, 0
    %s63 = sadd.s32 %s62, 1
    %s64 = scalar_select %p61, %s62, %s63
    %p67 = pneg %p61
    %p68 = scmp.eq.s32.totalorder %s12, 15
    %p69 = por %p67, %p68
    %p70 = scmp.ne.s32.totalorder %s62, %s65
    %p71 = scmp.eq.s32.totalorder %s12, 0
    %p72 = por %p70, %p71
    %p73 = scmp.ne.s32.totalorder %s62, %s65
    %p74 = scmp.eq.s32.totalorder %s17, 15
    %p75 = por %p73, %p74
    %p76 = scmp.ne.s32.totalorder %s65, %s66
    %p77 = scmp.eq.s32.totalorder %s17, 0
    %p78 = por %p76, %p77
    %p79 = scmp.ne.s32.totalorder %s65, %s66
    %p80 = scmp.eq.s32.totalorder %s18, 15
    %p81 = por %p79, %p80
    %p83 = scmp.ne.s32.totalorder %s66, %s82
    %p84 = scmp.eq.s32.totalorder %s18, 0
    %p85 = por %p83, %p84
    %s87 = sadd.s32 %s86, 1
    %p90 = scmp.eq.s32.totalorder %s12, 15
    %p91 = scmp.ne.s32.totalorder %s86, %s88
    %p92 = scmp.eq.s32.totalorder %s12, 0
    %p93 = por %p91, %p92
    %p94 = scmp.ne.s32.totalorder %s86, %s88
    %p95 = scmp.eq.s32.totalorder %s17, 15
    %p96 = por %p94, %p95
    %p97 = scmp.ne.s32.totalorder %s88, %s89
    %p98 = scmp.eq.s32.totalorder %s17, 0
    %p99 = por %p97, %p98
    %p100 = scmp.ne.s32.totalorder %s88, %s89
    %p101 = scmp.eq.s32.totalorder %s18, 15
    %p102 = por %p100, %p101
    %p104 = scmp.ne.s32.totalorder %s89, %s103
    %p105 = scmp.eq.s32.totalorder %s18, 0
    %p106 = por %p104, %p105
    %s108 = sadd.s32 %s107, 1
    %p111 = scmp.eq.s32.totalorder %s12, 15
    %p112 = scmp.ne.s32.totalorder %s107, %s109
    %p113 = scmp.eq.s32.totalorder %s12, 0
    %p114 = por %p112, %p113
    %p115 = scmp.ne.s32.totalorder %s107, %s109
    %p116 = scmp.eq.s32.totalorder %s17, 15
    %p117 = por %p115, %p116
    %p118 = scmp.ne.s32.totalorder %s109, %s110
    %p119 = scmp.eq.s32.totalorder %s17, 0
    %p120 = por %p118, %p119
    %p121 = scmp.ne.s32.totalorder %s109, %s110
    %p122 = scmp.eq.s32.totalorder %s18, 15
    %p123 = por %p121, %p122
    %p125 = scmp.ne.s32.totalorder %s110, %s124
    %p126 = scmp.eq.s32.totalorder %s18, 0
    %p127 = por %p125, %p126
    %s129 = sadd.s32 %s128, 1
    %p132 = scmp.eq.s32.totalorder %s12, 15
    %p133 = scmp.ne.s32.totalorder %s128, %s130
    %p134 = scmp.eq.s32.totalorder %s12, 0
    %p135 = por %p133, %p134
    %p136 = scmp.ne.s32.totalorder %s128, %s130
    %p137 = scmp.eq.s32.totalorder %s17, 15
    %p138 = por %p136, %p137
    %p139 = scmp.ne.s32.totalorder %s130, %s131
    %p140 = scmp.eq.s32.totalorder %s17, 0
    %p141 = por %p139, %p140
    %p142 = scmp.ne.s32.totalorder %s130, %s131
    %p143 = scmp.eq.s32.totalorder %s18, 15
    %p144 = por %p142, %p143
    %p146 = scmp.ne.s32.totalorder %s131, %s145
    %p147 = scmp.eq.s32.totalorder %s18, 0
    %p148 = por %p146, %p147
    %s150 = sadd.s32 %s149, 1
    %p153 = scmp.eq.s32.totalorder %s12, 15
    %p154 = scmp.ne.s32.totalorder %s149, %s151
    %p155 = scmp.eq.s32.totalorder %s12, 0
    %p156 = por %p154, %p155
    %p157 = scmp.ne.s32.totalorder %s149, %s151
    %p158 = scmp.eq.s32.totalorder %s17, 15
    %p159 = por %p157, %p158
    %p160 = scmp.ne.s32.totalorder %s151, %s152
    %p161 = scmp.eq.s32.totalorder %s17, 0
    %p162 = por %p160, %p161
    %p163 = scmp.ne.s32.totalorder %s151, %s152
    %p164 = scmp.eq.s32.totalorder %s18, 15
    %p165 = por %p163, %p164
    %p167 = scmp.ne.s32.totalorder %s152, %s166
    %p168 = scmp.eq.s32.totalorder %s18, 0
    %p169 = por %p167, %p168
    %s170 = ssub.s32 %s19, %s31
    %p171 = scmp.eq.s32.totalorder %s170, 0
    %s173 = sadd.s32 %s172, 1
    %s174 = scalar_select %p171, %s172, %s173
    %p177 = pneg %p171
    %p178 = scmp.eq.s32.totalorder %s12, 15
    %p179 = por %p177, %p178
    %p180 = scmp.ne.s32.totalorder %s172, %s175
    %p181 = scmp.eq.s32.totalorder %s12, 0
    %p182 = por %p180, %p181
    %p183 = scmp.ne.s32.totalorder %s172, %s175
    %p184 = scmp.eq.s32.totalorder %s17, 15
    %p185 = por %p183, %p184
    %p186 = scmp.ne.s32.totalorder %s175, %s176
    %p187 = scmp.eq.s32.totalorder %s17, 0
    %p188 = por %p186, %p187
    %p189 = scmp.ne.s32.totalorder %s175, %s176
    %p190 = scmp.eq.s32.totalorder %s18, 15
    %p191 = por %p189, %p190
    %p193 = scmp.ne.s32.totalorder %s176, %s192
    %p194 = scmp.eq.s32.totalorder %s18, 0
    %p195 = por %p193, %p194
    %p196 = scmp.le.s32.totalorder 1, %s12
    %p197 = scmp.lt.s32.totalorder %s12, 17
    %p198 = pnand %p196, %p197
    %p199 = pneg %p198
    // Predicated region
    $region9: #{gin_net_forward.2} parent=5 // pred_check
      _
    $region10: #{gin_net_forward.2} parent=5 // pred_check_branch
      %201 = sbr.rel (%p198) target = $region12
    $region11: #{gin_net_forward.2} parent=5 // pred_region
      %s202 = ssub.s32 %s12, 1
      // Predicated region
      $region13: #{gin_net_forward.2} parent=11 // pred_check
        %p203 = pneg %p99
      $region14: #{gin_net_forward.2} parent=11 // pred_check_branch
        %205 = sbr.rel (%p203) target = $region16
      $region15: #{gin_net_forward.2} parent=11 // pred_region
        _
      $region16: #{gin_net_forward.2} parent=11 // pred_fallthru
        _
      // Predicated region
      $region17: #{gin_net_forward.2} parent=11 // pred_check
        %p206 = pneg %p120
      $region18: #{gin_net_forward.2} parent=11 // pred_check_branch
        %208 = sbr.rel (%p206) target = $region20
      $region19: #{gin_net_forward.2} parent=11 // pred_region
        _
      $region20: #{gin_net_forward.2} parent=11 // pred_fallthru
        _
      // Predicated region
      $region21: #{gin_net_forward.2} parent=11 // pred_check
        %p209 = pneg %p141
      $region22: #{gin_net_forward.2} parent=11 // pred_check_branch
        %211 = sbr.rel (%p209) target = $region24
      $region23: #{gin_net_forward.2} parent=11 // pred_region
        _
      $region24: #{gin_net_forward.2} parent=11 // pred_fallthru
        _
      // Predicated region
      $region25: #{gin_net_forward.2} parent=11 // pred_check
        %p212 = pneg %p162
      $region26: #{gin_net_forward.2} parent=11 // pred_check_branch
        %214 = sbr.rel (%p212) target = $region28
      $region27: #{gin_net_forward.2} parent=11 // pred_region
        _
      $region28: #{gin_net_forward.2} parent=11 // pred_fallthru
        _
    $region12: #{gin_net_forward.2} parent=5 // pred_fallthru
      _
    %p215 = scmp.lt.s32.totalorder %s12, 16
    // Predicated region
    $region29: #{gin_net_forward.2} parent=5 // pred_check
      %p216 = pneg %p215
    $region30: #{gin_net_forward.2} parent=5 // pred_check_branch
      %218 = sbr.rel (%p216) target = $region32
    $region31: #{gin_net_forward.2} parent=5 // pred_region
      // Predicated region
      $region33: #{gin_net_forward.2} parent=31 // pred_check
        %p219 = pneg %p46
      $region34: #{gin_net_forward.2} parent=31 // pred_check_branch
        %221 = sbr.rel (%p219) target = $region36
      $region35: #{gin_net_forward.2} parent=31 // pred_region
        %p222 = scmp.lt.s32.totalorder %s19, 7
        %s223 = scalar_select %p222, %s19, 7
        %p224 = scmp.lt.s32.totalorder %s20, 1
        %s225 = scalar_select %p224, %s20, 1
        %s226 = smul.addr %s223, 2
        %s227 = sadd.s32 %s225, %s226
        %s228 = smul.addr %s227, 8
        %s229 = scalar_lea.vmem %s0, %s228
      $region36: #{gin_net_forward.2} parent=31 // pred_fallthru
        _
      // Predicated region
      $region37: #{gin_net_forward.2} parent=31 // pred_check
        %p230 = pneg %p72
      $region38: #{gin_net_forward.2} parent=31 // pred_check_branch
        %232 = sbr.rel (%p230) target = $region40
      $region39: #{gin_net_forward.2} parent=31 // pred_region
        %s233 = smul.u32 16, %s20
        %p234 = scmp.lt.s32.totalorder %s233, 31
        %s235 = scalar_select %p234, %s233, 31
        %s236 = smul.addr %s235, 4
        %s237 = scalar_lea.vmem %s1, %s236
        %s238 = smul.u32 16, %s20
      $region40: #{gin_net_forward.2} parent=31 // pred_fallthru
        _
    $region32: #{gin_net_forward.2} parent=5 // pred_fallthru
      _
    %p239 = scmp.le.s32.totalorder 1, %s12
    %p240 = scmp.lt.s32.totalorder %s12, 17
    %p241 = pnand %p239, %p240
    %p242 = pneg %p241
    // Predicated region
    $region41: #{gin_net_forward.2} parent=5 // pred_check
      _
    $region42: #{gin_net_forward.2} parent=5 // pred_check_branch
      %244 = sbr.rel (%p241) target = $region44
    $region43: #{gin_net_forward.2} parent=5 // pred_region
      %s245 = ssub.s32 %s12, 1
      %p246 = scmp.lt.s32.totalorder %s21, 7
      %s247 = scalar_select %p246, %s21, 7
      %p248 = scmp.lt.s32.totalorder %s22, 1
      %s249 = scalar_select %p248, %s22, 1
      %s250 = smul.addr %s247, 2
      %s251 = sadd.s32 %s249, %s250
      %s252 = smul.addr %s251, 8
      %s253 = scalar_lea.vmem %s0, %s252
      %p254 = pneg %p52
      %p255 = pneg %p49
      %s256 = smul.u32 16, %s22
      %p257 = scmp.lt.s32.totalorder %s256, 31
      %s258 = scalar_select %p257, %s256, 31
      %s259 = smul.addr %s258, 4
      %s260 = scalar_lea.vmem %s1, %s259
      %p261 = pneg %p78
      %p262 = pneg %p75
      %p263 = pneg %p99
      %p264 = pneg %p96
      %p265 = pneg %p120
      %p266 = pneg %p117
      %p267 = pneg %p141
      %p268 = pneg %p138
      %p269 = pneg %p162
      %p270 = pneg %p159
      %p271 = pneg %p188
      %p272 = pneg %p185
      %s273 = smul.u32 4, %s21
      %p274 = scmp.lt.s32.totalorder %s273, 31
      %s275 = scalar_select %p274, %s273, 31
      %s276 = smul.addr %s275, 4
      %s277 = scalar_lea.vmem %s6, %s276
      %p278 = scmp.lt.s32.totalorder %s21, 7
      %s279 = scalar_select %p278, %s21, 7
      %p280 = scmp.lt.s32.totalorder %s22, 1
      %s281 = scalar_select %p280, %s22, 1
      %s282 = smul.addr %s279, 2
      %s283 = sadd.s32 %s281, %s282
      %s284 = smul.addr %s283, 8
      %s285 = scalar_lea.vmem %s0, %s284
      %s286 = smul.u32 16, %s22
      %p287 = scmp.lt.s32.totalorder %s286, 31
      %s288 = scalar_select %p287, %s286, 31
      %s289 = smul.addr %s288, 4
      %s290 = scalar_lea.vmem %s1, %s289
      %s291 = smul.u32 16, %s22
      %s292 = smul.u32 4, %s21
      %p293 = scmp.lt.s32.totalorder %s292, 31
      %s294 = scalar_select %p293, %s292, 31
      %s295 = smul.addr %s294, 4
      %s296 = scalar_lea.vmem %s6, %s295
      %s297 = smul.u32 4, %s21
      %p299 = scmp.eq.s32.totalorder %s22, 0
      // Predicated region
      $region45: #{gin_net_forward.2} parent=43 // pred_check
        %p300 = pneg %p299
      $region46: #{gin_net_forward.2} parent=43 // pred_check_branch
        %302 = sbr.rel (%p300) target = $region48
      $region47: #{gin_net_forward.2} parent=43 // pred_region
        %vm303 = vcmask 64512
        %304 = vst.msk [vmem:[#allocation2] sm:$0xff] %vm303, 0.0
        %305 = vst.msk [vmem:[#allocation2 + $0x8] sm:$0xff] %vm303, 0.0
        %306 = vst.msk [vmem:[#allocation2 + $0x10] sm:$0xff] %vm303, 0.0
        %307 = vst.msk [vmem:[#allocation2 + $0x18] sm:$0xff] %vm303, 0.0
      $region48: #{gin_net_forward.2} parent=43 // pred_fallthru
        _
      %v308 = vld [vmem:[#allocation2] sm:$0xff]
      %v309 = vld [vmem:[#allocation2 + $0x8] sm:$0xff]
      %v310 = vld [vmem:[#allocation2 + $0x10] sm:$0xff]
      %v311 = vld [vmem:[#allocation2 + $0x18] sm:$0xff]
      %v312 = vld [vmem:[%s285] sm:$0xff]
      %v313 = vunpack.c.0.s8 %v312
      %v314 = vunpack.c.1.s8 %v312
      %v315 = vunpack.c.2.s8 %v312
      %v316 = vunpack.c.3.s8 %v312
      %v317 = vcvt.s32.f32 %v313
      %v318 = vcvt.s32.f32 %v314
      %v319 = vcvt.s32.f32 %v315
      %v320 = vcvt.s32.f32 %v316
      %v321 = vpack.c.bf16 %v318, %v317
      %v322 = vpack.c.bf16 %v320, %v319
      %v323 = vld [vmem:[%s290] sm:$0xf]
      %v324 = vld [vmem:[%s290 + $0x4] sm:$0xf]
      %v325 = vld [vmem:[%s290 + $0x8] sm:$0xf]
      %v326 = vld [vmem:[%s290 + $0xc] sm:$0xf]
      %v327 = vld [vmem:[%s290 + $0x10] sm:$0xf]
      %v328 = vld [vmem:[%s290 + $0x14] sm:$0xf]
      %v329 = vld [vmem:[%s290 + $0x18] sm:$0xf]
      %v330 = vld [vmem:[%s290 + $0x1c] sm:$0xf]
      %v331 = vld [vmem:[%s290 + $0x20] sm:$0xf]
      %v332 = vld [vmem:[%s290 + $0x24] sm:$0xf]
      %v333 = vld [vmem:[%s290 + $0x28] sm:$0xf]
      %v334 = vld [vmem:[%s290 + $0x2c] sm:$0xf]
      %v335 = vld [vmem:[%s290 + $0x30] sm:$0xf]
      %v336 = vld [vmem:[%s290 + $0x34] sm:$0xf]
      %v337 = vld [vmem:[%s290 + $0x38] sm:$0xf]
      %v338 = vld [vmem:[%s290 + $0x3c] sm:$0xf]
      %v355 = vunpack.c.l.b16 %v323
      %v356 = vunpack.c.l.b16 %v324
      %v357 = vunpack.c.l.b16 %v325
      %v358 = vunpack.c.l.b16 %v326
      %v359 = vunpack.c.l.b16 %v327
      %v360 = vunpack.c.l.b16 %v328
      %v361 = vunpack.c.l.b16 %v329
      %v362 = vunpack.c.l.b16 %v330
      %v363 = vunpack.c.l.b16 %v331
      %v364 = vunpack.c.l.b16 %v332
      %v365 = vunpack.c.l.b16 %v333
      %v366 = vunpack.c.l.b16 %v334
      %v367 = vunpack.c.l.b16 %v335
      %v368 = vunpack.c.l.b16 %v336
      %v369 = vunpack.c.l.b16 %v337
      %v370 = vunpack.c.l.b16 %v338
      %v371 = vpack.c.b16 %v356, %v355
      %v372 = vpack.c.b16 %v358, %v357
      %v373 = vpack.c.b16 %v360, %v359
      %v374 = vpack.c.b16 %v362, %v361
      %v375 = vpack.c.b16 %v364, %v363
      %v376 = vpack.c.b16 %v366, %v365
      %v377 = vpack.c.b16 %v368, %v367
      %v378 = vpack.c.b16 %v370, %v369
      %387 = vmatpush.bf16.msra.mxu0 %v378
      %388 = vmatpush.bf16.msra.mxu0 %v377
      %389 = vmatpush.bf16.msra.mxu0 %v376
      %390 = vmatpush.bf16.msra.mxu0 %v375
      %391 = vmatpush.bf16.msra.mxu0 %v374
      %392 = vmatpush.bf16.msra.mxu0 %v373
      %393 = vmatpush.bf16.msra.mxu0 %v372
      %394 = vmatpush.bf16.msra.mxu0 %v371
      %395 = vmatmul.bf16.gmra.mxu0 %v321
      %v396 = vpop.f32.mrf.mxu0
      %v397 = vadd.f32 0.0, %v396
      %v398 = vpop.f32.mrf.mxu0
      %v399 = vadd.f32 0.0, %v398
      %400 = vmatmul.bf16.gmra.mxu0 %v322
      %v401 = vpop.f32.mrf.mxu0
      %v402 = vadd.f32 0.0, %v401
      %v403 = vpop.f32.mrf.mxu0
      %v404 = vadd.f32 0.0, %v403
      %405 = vdwg.mxu0
      %v406 = vadd.f32 %v308, %v397
      %v407 = vadd.f32 %v309, %v399
      %v408 = vadd.f32 %v310, %v402
      %v409 = vadd.f32 %v311, %v404
      %vm410 = vcmask 64512
      %411 = vst.msk [vmem:[#allocation2] sm:$0xff] %vm410, %v406
      %412 = vst.msk [vmem:[#allocation2 + $0x8] sm:$0xff] %vm410, %v407
      %413 = vst.msk [vmem:[#allocation2 + $0x10] sm:$0xff] %vm410, %v408
      %414 = vst.msk [vmem:[#allocation2 + $0x18] sm:$0xff] %vm410, %v409
      %p415 = scmp.eq.s32.totalorder %s22, 1
      // Predicated region
      $region49: #{gin_net_forward.2} parent=43 // pred_check
        %p416 = pneg %p415
      $region50: #{gin_net_forward.2} parent=43 // pred_check_branch
        %418 = sbr.rel (%p416) target = $region52
      $region51: #{gin_net_forward.2} parent=43 // pred_region
        %v419 = vld [vmem:[#allocation2] sm:$0xff]
        %v420 = vld [vmem:[#allocation2 + $0x8] sm:$0xff]
        %v421 = vld [vmem:[#allocation2 + $0x10] sm:$0xff]
        %v422 = vld [vmem:[#allocation2 + $0x18] sm:$0xff]
        %v423 = vpack.c.bf16 %v420, %v419
        %v424 = vpack.c.bf16 %v422, %v421
        %v425 = vld [vmem:[%s2] sm:$0xf]
        %v426 = vld [vmem:[%s3] sm:$0x1]
        %v428 = vperm.slane %v426, 0
        %v431 = vsel %vm410, %v423, 0
        %v434 = vsel %vm410, %v424, 0
        %vm436 = vcmask 1043456
        %v438 = vsel %vm436, %v425, 0
        %440 = vmatpush.bf16.msra.mxu0 0
        %441 = vmatpush.bf16.msra.mxu0 0
        %442 = vmatpush.bf16.msra.mxu0 0
        %443 = vmatpush.bf16.msra.mxu0 0
        %444 = vmatpush.bf16.msra.mxu0 0
        %445 = vmatpush.bf16.msra.mxu0 0
        %446 = vmatpush.bf16.msra.mxu0 0
        %447 = vmatpush.bf16.msra.mxu0 %v438
        %448 = vmatmul.bf16.gmra.mxu0 %v431
        %v449 = vpop.f32.mrf.mxu0
        %v450 = vadd.f32 %v428, %v449
        %v451 = vpop.f32.mrf.mxu0
        %v452 = vadd.f32 %v428, %v451
        %453 = vmatmul.bf16.gmra.mxu0 %v434
        %v454 = vpop.f32.mrf.mxu0
        %v455 = vadd.f32 %v428, %v454
        %v456 = vpop.f32.mrf.mxu0
        %v457 = vadd.f32 %v428, %v456
        %458 = vdwg.mxu0
        %v459 = vmax.f32 %v450, 0.0
        %v460 = vmax.f32 %v452, 0.0
        %v461 = vmax.f32 %v455, 0.0
        %v462 = vmax.f32 %v457, 0.0
        %v463 = vpack.c.bf16 %v460, %v459
        %v464 = vpack.c.bf16 %v462, %v461
        %v465 = vld [vmem:[%s4] sm:$0xf]
        %v466 = vld [vmem:[%s4 + $0x4] sm:$0xf]
        %v467 = vld [vmem:[%s4 + $0x8] sm:$0xf]
        %v468 = vld [vmem:[%s4 + $0xc] sm:$0xf]
        %v469 = vld [vmem:[%s4 + $0x10] sm:$0xf]
        %v470 = vld [vmem:[%s4 + $0x14] sm:$0xf]
        %v471 = vld [vmem:[%s4 + $0x18] sm:$0xf]
        %v472 = vld [vmem:[%s4 + $0x1c] sm:$0xf]
        %v473 = vld [vmem:[%s4 + $0x20] sm:$0xf]
        %v474 = vld [vmem:[%s4 + $0x24] sm:$0xf]
        %v475 = vld [vmem:[%s4 + $0x28] sm:$0xf]
        %v476 = vld [vmem:[%s4 + $0x2c] sm:$0xf]
        %v477 = vld [vmem:[%s4 + $0x30] sm:$0xf]
        %v478 = vld [vmem:[%s4 + $0x34] sm:$0xf]
        %v479 = vld [vmem:[%s4 + $0x38] sm:$0xf]
        %v480 = vld [vmem:[%s4 + $0x3c] sm:$0xf]
        %v481 = vld [vmem:[%s5] sm:$0x1]
        %v483 = vperm.slane %v481, 0
        %v501 = vunpack.c.l.b16 %v465
        %v502 = vunpack.c.l.b16 %v466
        %v503 = vunpack.c.l.b16 %v467
        %v504 = vunpack.c.l.b16 %v468
        %v505 = vunpack.c.l.b16 %v469
        %v506 = vunpack.c.l.b16 %v470
        %v507 = vunpack.c.l.b16 %v471
        %v508 = vunpack.c.l.b16 %v472
        %v509 = vunpack.c.l.b16 %v473
        %v510 = vunpack.c.l.b16 %v474
        %v511 = vunpack.c.l.b16 %v475
        %v512 = vunpack.c.l.b16 %v476
        %v513 = vunpack.c.l.b16 %v477
        %v514 = vunpack.c.l.b16 %v478
        %v515 = vunpack.c.l.b16 %v479
        %v516 = vunpack.c.l.b16 %v480
        %v517 = vpack.c.b16 %v502, %v501
        %v518 = vpack.c.b16 %v504, %v503
        %v519 = vpack.c.b16 %v506, %v505
        %v520 = vpack.c.b16 %v508, %v507
        %v521 = vpack.c.b16 %v510, %v509
        %v522 = vpack.c.b16 %v512, %v511
        %v523 = vpack.c.b16 %v514, %v513
        %v524 = vpack.c.b16 %v516, %v515
        %533 = vmatpush.bf16.msra.mxu0 %v524
        %534 = vmatpush.bf16.msra.mxu0 %v523
        %535 = vmatpush.bf16.msra.mxu0 %v522
        %536 = vmatpush.bf16.msra.mxu0 %v521
        %537 = vmatpush.bf16.msra.mxu0 %v520
        %538 = vmatpush.bf16.msra.mxu0 %v519
        %539 = vmatpush.bf16.msra.mxu0 %v518
        %540 = vmatpush.bf16.msra.mxu0 %v517
        %541 = vmatmul.bf16.gmra.mxu0 %v463
        %v542 = vpop.f32.mrf.mxu0
        %v543 = vadd.f32 %v483, %v542
        %v544 = vpop.f32.mrf.mxu0
        %v545 = vadd.f32 %v483, %v544
        %546 = vmatmul.bf16.gmra.mxu0 %v464
        %v547 = vpop.f32.mrf.mxu0
        %v548 = vadd.f32 %v483, %v547
        %v549 = vpop.f32.mrf.mxu0
        %v550 = vadd.f32 %v483, %v549
        %551 = vdwg.mxu0
        %v552 = vmax.f32 %v543, 0.0
        %v553 = vmax.f32 %v545, 0.0
        %v554 = vmax.f32 %v548, 0.0
        %v555 = vmax.f32 %v550, 0.0
        %v556 = vpack.c.bf16 %v552, %v552
        %v557 = vpack.c.bf16 %v553, %v553
        %v558 = vpack.c.bf16 %v554, %v554
        %v559 = vpack.c.bf16 %v555, %v555
        %560 = vst [vmem:[%s296] sm:$0xf] %v556
        %561 = vst [vmem:[%s296 + $0x4] sm:$0xf] %v557
        %562 = vst [vmem:[%s296 + $0x8] sm:$0xf] %v558
        %563 = vst [vmem:[%s296 + $0xc] sm:$0xf] %v559
      $region52: #{gin_net_forward.2} parent=43 // pred_fallthru
        _
      %s564 = smul.u32 4, %s21
      %p565 = scmp.lt.s32.totalorder %s564, 31
      %s566 = scalar_select %p565, %s564, 31
      %s567 = smul.addr %s566, 4
      %s568 = scalar_lea.vmem %s6, %s567
      // Predicated region
      $region53: #{gin_net_forward.2} parent=43 // pred_check
        %p569 = pneg %p185
      $region54: #{gin_net_forward.2} parent=43 // pred_check_branch
        %571 = sbr.rel (%p569) target = $region56
      $region55: #{gin_net_forward.2} parent=43 // pred_region
        %s572 = smul.u32 4, %s21
      $region56: #{gin_net_forward.2} parent=43 // pred_fallthru
        _
    $region44: #{gin_net_forward.2} parent=5 // pred_fallthru
      _
    %p573 = scmp.le.s32.totalorder 2, %s12
    // Predicated region
    $region57: #{gin_net_forward.2} parent=5 // pred_check
      %p574 = pneg %p573
    $region58: #{gin_net_forward.2} parent=5 // pred_check_branch
      %576 = sbr.rel (%p574) target = $region60
    $region59: #{gin_net_forward.2} parent=5 // pred_region
      %s577 = ssub.s32 %s12, 2
      // Predicated region
      $region61: #{gin_net_forward.2} parent=59 // pred_check
        %p578 = pneg %p191
      $region62: #{gin_net_forward.2} parent=59 // pred_check_branch
        %580 = sbr.rel (%p578) target = $region64
      $region63: #{gin_net_forward.2} parent=59 // pred_region
        %s581 = smul.u32 4, %s23
        %p582 = scmp.lt.s32.totalorder %s581, 31
        %s583 = scalar_select %p582, %s581, 31
        %s584 = smul.addr %s583, 4
        %s585 = scalar_lea.vmem %s6, %s584
      $region64: #{gin_net_forward.2} parent=59 // pred_fallthru
        _
    $region60: #{gin_net_forward.2} parent=5 // pred_fallthru
      _
  $region6: #{gin_net_forward.2} parent=0 // loop_footer
    %s16 = sadd.s32 1, %s12
  $region7: #{gin_net_forward.2} parent=0 // loop_footer_branch
    %11 = sbr.rel target = $region3
  $region8: #{gin_net_forward.2} parent=0 // loop_exit
    _

// kernel: gin_net_forward.3
$region0: #{gin_net_forward.3}
  #allocation0 [shape = 'u32[]', space=smem, size = 0x4, offset = 0x4, fixed_abs, tag = 'smem constant byte address 0x4 - core index']
  #allocation1 [shape = 'u32[72,128]{1,0:T(1,128)}', space=vmem, size = 0x9000, scoped, tag = 'internal scratch']
  #allocation2 [shape = 'f32[32,128]{1,0:T(8,128)}', space=vmem, size = 0x4000, scoped, tag = 'scratch operand']
  %s0 = inlined_call_operand.vmem [shape: s8[256,256], index: 0, kind: input, shape index: {}]
  %s1 = inlined_call_operand.vmem [shape: bf16[256,128], index: 1, kind: input, shape index: {}]
  %s2 = inlined_call_operand.vmem [shape: bf16[128,128], index: 2, kind: input, shape index: {}]
  %s3 = inlined_call_operand.vmem [shape: f32[1,128], index: 3, kind: input, shape index: {}]
  %s4 = inlined_call_operand.vmem [shape: bf16[128,128], index: 4, kind: input, shape index: {}]
  %s5 = inlined_call_operand.vmem [shape: f32[1,128], index: 5, kind: input, shape index: {}]
  %s6 = inlined_call_operand.vmem [shape: bf16[128,128], index: 6, kind: input, shape index: {}]
  %s7 = inlined_call_operand.vmem [shape: f32[1,128], index: 7, kind: input, shape index: {}]
  %s8 = inlined_call_operand.vmem [shape: f32[256,128], index: 8, kind: output, shape index: {}]
  %s9 = sld [smem:[#allocation0]]
  $region73: #{gin_net_forward.3} parent=0
    _
  %s11 = ssub.s32 1, %s9
  %s12 = scalar_select 0, %s11, %s9
  loop: start=0, step=1, limit=18
  $region2: #{gin_net_forward.3} parent=0 // loop_pre_header
    _
  $region3: #{gin_net_forward.3} parent=0 // loop_header
    %s14 = sphi 0, %s18
    %p15 = scmp.ge.s32.totalorder %s14, 18
    %s21 = sphi 0, %s33
    %s22 = sphi 0, %s29
    %s23 = sphi 0, %s21
    %s24 = sphi 0, %s22
    %s25 = sphi 0, %s23
    %s26 = sphi 0, %s24
    %s38 = sphi 0, %s40
    %s41 = sphi 0, %s38
    %s42 = sphi 0, %s41
    %s58 = sphi 0, %s42
    %s64 = sphi 0, %s66
    %s67 = sphi 0, %s64
    %s68 = sphi 0, %s67
    %s84 = sphi 0, %s68
    %s88 = sphi 0, %s88
    %s90 = sphi 0, %s88
    %s91 = sphi 0, %s90
    %s105 = sphi 0, %s91
    %s109 = sphi 0, %s109
    %s111 = sphi 0, %s109
    %s112 = sphi 0, %s111
    %s126 = sphi 0, %s112
    %s130 = sphi 0, %s130
    %s132 = sphi 0, %s130
    %s133 = sphi 0, %s132
    %s147 = sphi 0, %s133
    %s151 = sphi 0, %s151
    %s153 = sphi 0, %s151
    %s154 = sphi 0, %s153
    %s168 = sphi 0, %s154
    %s172 = sphi 0, %s172
    %s174 = sphi 0, %s172
    %s175 = sphi 0, %s174
    %s189 = sphi 0, %s175
    %s193 = sphi 0, %s193
    %s195 = sphi 0, %s193
    %s196 = sphi 0, %s195
    %s210 = sphi 0, %s196
    %s216 = sphi 0, %s218
    %s219 = sphi 0, %s216
    %s220 = sphi 0, %s219
    %s236 = sphi 0, %s220
  $region4: #{gin_net_forward.3} parent=0 // loop_header_branch
    %17 = sbr.rel (%p15) target = $region8
  $region5: #{gin_net_forward.3} parent=0 // loop_body
    %s19 = ssub.s32 %s14, 1
    %s20 = ssub.s32 %s14, 2
    %s27 = sadd.s32 1, %s22
    %p28 = scmp.ge.s32.totalorder %s27, 2
    %s29 = scalar_select %p28, 0, %s27
    %s30 = sadd.s32 1, %s21
    %s31 = scalar_select %p28, %s30, %s21
    %p32 = scmp.ge.s32.totalorder %s31, 8
    %s33 = scalar_select %p32, 0, %s31
    %s34 = ssub.s32 %s21, %s33
    %s35 = ssub.s32 %s22, %s29
    %s36 = sor.u32 %s34, %s35
    %p37 = scmp.eq.s32.totalorder %s36, 0
    %s39 = sadd.s32 %s38, 1
    %s40 = scalar_select %p37, %s38, %s39
    %p43 = pneg %p37
    %p44 = scmp.eq.s32.totalorder %s14, 15
    %p45 = por %p43, %p44
    %p46 = scmp.ne.s32.totalorder %s38, %s41
    %p47 = scmp.eq.s32.totalorder %s14, 0
    %p48 = por %p46, %p47
    %p49 = scmp.ne.s32.totalorder %s38, %s41
    %p50 = scmp.eq.s32.totalorder %s19, 15
    %p51 = por %p49, %p50
    %p52 = scmp.ne.s32.totalorder %s41, %s42
    %p53 = scmp.eq.s32.totalorder %s19, 0
    %p54 = por %p52, %p53
    %p55 = scmp.ne.s32.totalorder %s41, %s42
    %p56 = scmp.eq.s32.totalorder %s20, 15
    %p57 = por %p55, %p56
    %p59 = scmp.ne.s32.totalorder %s42, %s58
    %p60 = scmp.eq.s32.totalorder %s20, 0
    %p61 = por %p59, %p60
    %s62 = ssub.s32 %s22, %s29
    %p63 = scmp.eq.s32.totalorder %s62, 0
    %s65 = sadd.s32 %s64, 1
    %s66 = scalar_select %p63, %s64, %s65
    %p69 = pneg %p63
    %p70 = scmp.eq.s32.totalorder %s14, 15
    %p71 = por %p69, %p70
    %p72 = scmp.ne.s32.totalorder %s64, %s67
    %p73 = scmp.eq.s32.totalorder %s14, 0
    %p74 = por %p72, %p73
    %p75 = scmp.ne.s32.totalorder %s64, %s67
    %p76 = scmp.eq.s32.totalorder %s19, 15
    %p77 = por %p75, %p76
    %p78 = scmp.ne.s32.totalorder %s67, %s68
    %p79 = scmp.eq.s32.totalorder %s19, 0
    %p80 = por %p78, %p79
    %p81 = scmp.ne.s32.totalorder %s67, %s68
    %p82 = scmp.eq.s32.totalorder %s20, 15
    %p83 = por %p81, %p82
    %p85 = scmp.ne.s32.totalorder %s68, %s84
    %p86 = scmp.eq.s32.totalorder %s20, 0
    %p87 = por %p85, %p86
    %s89 = sadd.s32 %s88, 1
    %p92 = scmp.eq.s32.totalorder %s14, 15
    %p93 = scmp.ne.s32.totalorder %s88, %s90
    %p94 = scmp.eq.s32.totalorder %s14, 0
    %p95 = por %p93, %p94
    %p96 = scmp.ne.s32.totalorder %s88, %s90
    %p97 = scmp.eq.s32.totalorder %s19, 15
    %p98 = por %p96, %p97
    %p99 = scmp.ne.s32.totalorder %s90, %s91
    %p100 = scmp.eq.s32.totalorder %s19, 0
    %p101 = por %p99, %p100
    %p102 = scmp.ne.s32.totalorder %s90, %s91
    %p103 = scmp.eq.s32.totalorder %s20, 15
    %p104 = por %p102, %p103
    %p106 = scmp.ne.s32.totalorder %s91, %s105
    %p107 = scmp.eq.s32.totalorder %s20, 0
    %p108 = por %p106, %p107
    %s110 = sadd.s32 %s109, 1
    %p113 = scmp.eq.s32.totalorder %s14, 15
    %p114 = scmp.ne.s32.totalorder %s109, %s111
    %p115 = scmp.eq.s32.totalorder %s14, 0
    %p116 = por %p114, %p115
    %p117 = scmp.ne.s32.totalorder %s109, %s111
    %p118 = scmp.eq.s32.totalorder %s19, 15
    %p119 = por %p117, %p118
    %p120 = scmp.ne.s32.totalorder %s111, %s112
    %p121 = scmp.eq.s32.totalorder %s19, 0
    %p122 = por %p120, %p121
    %p123 = scmp.ne.s32.totalorder %s111, %s112
    %p124 = scmp.eq.s32.totalorder %s20, 15
    %p125 = por %p123, %p124
    %p127 = scmp.ne.s32.totalorder %s112, %s126
    %p128 = scmp.eq.s32.totalorder %s20, 0
    %p129 = por %p127, %p128
    %s131 = sadd.s32 %s130, 1
    %p134 = scmp.eq.s32.totalorder %s14, 15
    %p135 = scmp.ne.s32.totalorder %s130, %s132
    %p136 = scmp.eq.s32.totalorder %s14, 0
    %p137 = por %p135, %p136
    %p138 = scmp.ne.s32.totalorder %s130, %s132
    %p139 = scmp.eq.s32.totalorder %s19, 15
    %p140 = por %p138, %p139
    %p141 = scmp.ne.s32.totalorder %s132, %s133
    %p142 = scmp.eq.s32.totalorder %s19, 0
    %p143 = por %p141, %p142
    %p144 = scmp.ne.s32.totalorder %s132, %s133
    %p145 = scmp.eq.s32.totalorder %s20, 15
    %p146 = por %p144, %p145
    %p148 = scmp.ne.s32.totalorder %s133, %s147
    %p149 = scmp.eq.s32.totalorder %s20, 0
    %p150 = por %p148, %p149
    %s152 = sadd.s32 %s151, 1
    %p155 = scmp.eq.s32.totalorder %s14, 15
    %p156 = scmp.ne.s32.totalorder %s151, %s153
    %p157 = scmp.eq.s32.totalorder %s14, 0
    %p158 = por %p156, %p157
    %p159 = scmp.ne.s32.totalorder %s151, %s153
    %p160 = scmp.eq.s32.totalorder %s19, 15
    %p161 = por %p159, %p160
    %p162 = scmp.ne.s32.totalorder %s153, %s154
    %p163 = scmp.eq.s32.totalorder %s19, 0
    %p164 = por %p162, %p163
    %p165 = scmp.ne.s32.totalorder %s153, %s154
    %p166 = scmp.eq.s32.totalorder %s20, 15
    %p167 = por %p165, %p166
    %p169 = scmp.ne.s32.totalorder %s154, %s168
    %p170 = scmp.eq.s32.totalorder %s20, 0
    %p171 = por %p169, %p170
    %s173 = sadd.s32 %s172, 1
    %p176 = scmp.eq.s32.totalorder %s14, 15
    %p177 = scmp.ne.s32.totalorder %s172, %s174
    %p178 = scmp.eq.s32.totalorder %s14, 0
    %p179 = por %p177, %p178
    %p180 = scmp.ne.s32.totalorder %s172, %s174
    %p181 = scmp.eq.s32.totalorder %s19, 15
    %p182 = por %p180, %p181
    %p183 = scmp.ne.s32.totalorder %s174, %s175
    %p184 = scmp.eq.s32.totalorder %s19, 0
    %p185 = por %p183, %p184
    %p186 = scmp.ne.s32.totalorder %s174, %s175
    %p187 = scmp.eq.s32.totalorder %s20, 15
    %p188 = por %p186, %p187
    %p190 = scmp.ne.s32.totalorder %s175, %s189
    %p191 = scmp.eq.s32.totalorder %s20, 0
    %p192 = por %p190, %p191
    %s194 = sadd.s32 %s193, 1
    %p197 = scmp.eq.s32.totalorder %s14, 15
    %p198 = scmp.ne.s32.totalorder %s193, %s195
    %p199 = scmp.eq.s32.totalorder %s14, 0
    %p200 = por %p198, %p199
    %p201 = scmp.ne.s32.totalorder %s193, %s195
    %p202 = scmp.eq.s32.totalorder %s19, 15
    %p203 = por %p201, %p202
    %p204 = scmp.ne.s32.totalorder %s195, %s196
    %p205 = scmp.eq.s32.totalorder %s19, 0
    %p206 = por %p204, %p205
    %p207 = scmp.ne.s32.totalorder %s195, %s196
    %p208 = scmp.eq.s32.totalorder %s20, 15
    %p209 = por %p207, %p208
    %p211 = scmp.ne.s32.totalorder %s196, %s210
    %p212 = scmp.eq.s32.totalorder %s20, 0
    %p213 = por %p211, %p212
    %s214 = ssub.s32 %s21, %s33
    %p215 = scmp.eq.s32.totalorder %s214, 0
    %s217 = sadd.s32 %s216, 1
    %s218 = scalar_select %p215, %s216, %s217
    %p221 = pneg %p215
    %p222 = scmp.eq.s32.totalorder %s14, 15
    %p223 = por %p221, %p222
    %p224 = scmp.ne.s32.totalorder %s216, %s219
    %p225 = scmp.eq.s32.totalorder %s14, 0
    %p226 = por %p224, %p225
    %p227 = scmp.ne.s32.totalorder %s216, %s219
    %p228 = scmp.eq.s32.totalorder %s19, 15
    %p229 = por %p227, %p228
    %p230 = scmp.ne.s32.totalorder %s219, %s220
    %p231 = scmp.eq.s32.totalorder %s19, 0
    %p232 = por %p230, %p231
    %p233 = scmp.ne.s32.totalorder %s219, %s220
    %p234 = scmp.eq.s32.totalorder %s20, 15
    %p235 = por %p233, %p234
    %p237 = scmp.ne.s32.totalorder %s220, %s236
    %p238 = scmp.eq.s32.totalorder %s20, 0
    %p239 = por %p237, %p238
    %p240 = scmp.le.s32.totalorder 1, %s14
    %p241 = scmp.lt.s32.totalorder %s14, 17
    %p242 = pnand %p240, %p241
    %p243 = pneg %p242
    // Predicated region
    $region9: #{gin_net_forward.3} parent=5 // pred_check
      _
    $region10: #{gin_net_forward.3} parent=5 // pred_check_branch
      %245 = sbr.rel (%p242) target = $region12
    $region11: #{gin_net_forward.3} parent=5 // pred_region
      %s246 = ssub.s32 %s14, 1
      // Predicated region
      $region13: #{gin_net_forward.3} parent=11 // pred_check
        %p247 = pneg %p101
      $region14: #{gin_net_forward.3} parent=11 // pred_check_branch
        %249 = sbr.rel (%p247) target = $region16
      $region15: #{gin_net_forward.3} parent=11 // pred_region
        _
      $region16: #{gin_net_forward.3} parent=11 // pred_fallthru
        _
      // Predicated region
      $region17: #{gin_net_forward.3} parent=11 // pred_check
        %p250 = pneg %p122
      $region18: #{gin_net_forward.3} parent=11 // pred_check_branch
        %252 = sbr.rel (%p250) target = $region20
      $region19: #{gin_net_forward.3} parent=11 // pred_region
        _
      $region20: #{gin_net_forward.3} parent=11 // pred_fallthru
        _
      // Predicated region
      $region21: #{gin_net_forward.3} parent=11 // pred_check
        %p253 = pneg %p143
      $region22: #{gin_net_forward.3} parent=11 // pred_check_branch
        %255 = sbr.rel (%p253) target = $region24
      $region23: #{gin_net_forward.3} parent=11 // pred_region
        _
      $region24: #{gin_net_forward.3} parent=11 // pred_fallthru
        _
      // Predicated region
      $region25: #{gin_net_forward.3} parent=11 // pred_check
        %p256 = pneg %p164
      $region26: #{gin_net_forward.3} parent=11 // pred_check_branch
        %258 = sbr.rel (%p256) target = $region28
      $region27: #{gin_net_forward.3} parent=11 // pred_region
        _
      $region28: #{gin_net_forward.3} parent=11 // pred_fallthru
        _
      // Predicated region
      $region29: #{gin_net_forward.3} parent=11 // pred_check
        %p259 = pneg %p185
      $region30: #{gin_net_forward.3} parent=11 // pred_check_branch
        %261 = sbr.rel (%p259) target = $region32
      $region31: #{gin_net_forward.3} parent=11 // pred_region
        _
      $region32: #{gin_net_forward.3} parent=11 // pred_fallthru
        _
      // Predicated region
      $region33: #{gin_net_forward.3} parent=11 // pred_check
        %p262 = pneg %p206
      $region34: #{gin_net_forward.3} parent=11 // pred_check_branch
        %264 = sbr.rel (%p262) target = $region36
      $region35: #{gin_net_forward.3} parent=11 // pred_region
        _
      $region36: #{gin_net_forward.3} parent=11 // pred_fallthru
        _
    $region12: #{gin_net_forward.3} parent=5 // pred_fallthru
      _
    %p265 = scmp.lt.s32.totalorder %s14, 16
    // Predicated region
    $region37: #{gin_net_forward.3} parent=5 // pred_check
      %p266 = pneg %p265
    $region38: #{gin_net_forward.3} parent=5 // pred_check_branch
      %268 = sbr.rel (%p266) target = $region40
    $region39: #{gin_net_forward.3} parent=5 // pred_region
      // Predicated region
      $region41: #{gin_net_forward.3} parent=39 // pred_check
        %p269 = pneg %p48
      $region42: #{gin_net_forward.3} parent=39 // pred_check_branch
        %271 = sbr.rel (%p269) target = $region44
      $region43: #{gin_net_forward.3} parent=39 // pred_region
        %p272 = scmp.lt.s32.totalorder %s21, 7
        %s273 = scalar_select %p272, %s21, 7
        %p274 = scmp.lt.s32.totalorder %s22, 1
        %s275 = scalar_select %p274, %s22, 1
        %s276 = smul.addr %s273, 2
        %s277 = sadd.s32 %s275, %s276
        %s278 = smul.addr %s277, 8
        %s279 = scalar_lea.vmem %s0, %s278
      $region44: #{gin_net_forward.3} parent=39 // pred_fallthru
        _
      // Predicated region
      $region45: #{gin_net_forward.3} parent=39 // pred_check
        %p280 = pneg %p74
      $region46: #{gin_net_forward.3} parent=39 // pred_check_branch
        %282 = sbr.rel (%p280) target = $region48
      $region47: #{gin_net_forward.3} parent=39 // pred_region
        %s283 = smul.u32 16, %s22
        %p284 = scmp.lt.s32.totalorder %s283, 31
        %s285 = scalar_select %p284, %s283, 31
        %s286 = smul.addr %s285, 4
        %s287 = scalar_lea.vmem %s1, %s286
        %s288 = smul.u32 16, %s22
      $region48: #{gin_net_forward.3} parent=39 // pred_fallthru
        _
    $region40: #{gin_net_forward.3} parent=5 // pred_fallthru
      _
    %p289 = scmp.le.s32.totalorder 1, %s14
    %p290 = scmp.lt.s32.totalorder %s14, 17
    %p291 = pnand %p289, %p290
    %p292 = pneg %p291
    // Predicated region
    $region49: #{gin_net_forward.3} parent=5 // pred_check
      _
    $region50: #{gin_net_forward.3} parent=5 // pred_check_branch
      %294 = sbr.rel (%p291) target = $region52
    $region51: #{gin_net_forward.3} parent=5 // pred_region
      %s295 = ssub.s32 %s14, 1
      %p296 = scmp.lt.s32.totalorder %s23, 7
      %s297 = scalar_select %p296, %s23, 7
      %p298 = scmp.lt.s32.totalorder %s24, 1
      %s299 = scalar_select %p298, %s24, 1
      %s300 = smul.addr %s297, 2
      %s301 = sadd.s32 %s299, %s300
      %s302 = smul.addr %s301, 8
      %s303 = scalar_lea.vmem %s0, %s302
      %p304 = pneg %p54
      %p305 = pneg %p51
      %s306 = smul.u32 16, %s24
      %p307 = scmp.lt.s32.totalorder %s306, 31
      %s308 = scalar_select %p307, %s306, 31
      %s309 = smul.addr %s308, 4
      %s310 = scalar_lea.vmem %s1, %s309
      %p311 = pneg %p80
      %p312 = pneg %p77
      %p313 = pneg %p101
      %p314 = pneg %p98
      %p315 = pneg %p122
      %p316 = pneg %p119
      %p317 = pneg %p143
      %p318 = pneg %p140
      %p319 = pneg %p164
      %p320 = pneg %p161
      %p321 = pneg %p185
      %p322 = pneg %p182
      %p323 = pneg %p206
      %p324 = pneg %p203
      %p325 = pneg %p232
      %p326 = pneg %p229
      %s327 = smul.u32 4, %s23
      %p328 = scmp.lt.s32.totalorder %s327, 31
      %s329 = scalar_select %p328, %s327, 31
      %s330 = smul.addr %s329, 8
      %s331 = scalar_lea.vmem %s8, %s330
      %p332 = scmp.lt.s32.totalorder %s23, 7
      %s333 = scalar_select %p332, %s23, 7
      %p334 = scmp.lt.s32.totalorder %s24, 1
      %s335 = scalar_select %p334, %s24, 1
      %s336 = smul.addr %s333, 2
      %s337 = sadd.s32 %s335, %s336
      %s338 = smul.addr %s337, 8
      %s339 = scalar_lea.vmem %s0, %s338
      %s340 = smul.u32 16, %s24
      %p341 = scmp.lt.s32.totalorder %s340, 31
      %s342 = scalar_select %p341, %s340, 31
      %s343 = smul.addr %s342, 4
      %s344 = scalar_lea.vmem %s1, %s343
      %s345 = smul.u32 16, %s24
      %s346 = smul.u32 4, %s23
      %p347 = scmp.lt.s32.totalorder %s346, 31
      %s348 = scalar_select %p347, %s346, 31
      %s349 = smul.addr %s348, 8
      %s350 = scalar_lea.vmem %s8, %s349
      %s351 = smul.u32 4, %s23
      %p352 = scmp.eq.s32.totalorder %s24, 0
      // Predicated region
      $region53: #{gin_net_forward.3} parent=51 // pred_check
        %p353 = pneg %p352
      $region54: #{gin_net_forward.3} parent=51 // pred_check_branch
        %355 = sbr.rel (%p353) target = $region56
      $region55: #{gin_net_forward.3} parent=51 // pred_region
        %356 = vst [vmem:[#allocation2] sm:$0xff] 0.0
        %357 = vst [vmem:[#allocation2 + $0x8] sm:$0xff] 0.0
        %358 = vst [vmem:[#allocation2 + $0x10] sm:$0xff] 0.0
        %359 = vst [vmem:[#allocation2 + $0x18] sm:$0xff] 0.0
      $region56: #{gin_net_forward.3} parent=51 // pred_fallthru
        _
      %v360 = vld [vmem:[#allocation2] sm:$0xff]
      %v361 = vld [vmem:[#allocation2 + $0x8] sm:$0xff]
      %v362 = vld [vmem:[#allocation2 + $0x10] sm:$0xff]
      %v363 = vld [vmem:[#allocation2 + $0x18] sm:$0xff]
      %v364 = vld [vmem:[%s339] sm:$0xff]
      %v365 = vunpack.c.0.s8 %v364
      %v366 = vunpack.c.1.s8 %v364
      %v367 = vunpack.c.2.s8 %v364
      %v368 = vunpack.c.3.s8 %v364
      %v369 = vcvt.s32.f32 %v365
      %v370 = vcvt.s32.f32 %v366
      %v371 = vcvt.s32.f32 %v367
      %v372 = vcvt.s32.f32 %v368
      %v373 = vpack.c.bf16 %v370, %v369
      %v374 = vpack.c.bf16 %v372, %v371
      %v375 = vld [vmem:[%s344] sm:$0xf]
      %v376 = vld [vmem:[%s344 + $0x4] sm:$0xf]
      %v377 = vld [vmem:[%s344 + $0x8] sm:$0xf]
      %v378 = vld [vmem:[%s344 + $0xc] sm:$0xf]
      %v379 = vld [vmem:[%s344 + $0x10] sm:$0xf]
      %v380 = vld [vmem:[%s344 + $0x14] sm:$0xf]
      %v381 = vld [vmem:[%s344 + $0x18] sm:$0xf]
      %v382 = vld [vmem:[%s344 + $0x1c] sm:$0xf]
      %v383 = vld [vmem:[%s344 + $0x20] sm:$0xf]
      %v384 = vld [vmem:[%s344 + $0x24] sm:$0xf]
      %v385 = vld [vmem:[%s344 + $0x28] sm:$0xf]
      %v386 = vld [vmem:[%s344 + $0x2c] sm:$0xf]
      %v387 = vld [vmem:[%s344 + $0x30] sm:$0xf]
      %v388 = vld [vmem:[%s344 + $0x34] sm:$0xf]
      %v389 = vld [vmem:[%s344 + $0x38] sm:$0xf]
      %v390 = vld [vmem:[%s344 + $0x3c] sm:$0xf]
      %v407 = vunpack.c.l.b16 %v375
      %v408 = vunpack.c.l.b16 %v376
      %v409 = vunpack.c.l.b16 %v377
      %v410 = vunpack.c.l.b16 %v378
      %v411 = vunpack.c.l.b16 %v379
      %v412 = vunpack.c.l.b16 %v380
      %v413 = vunpack.c.l.b16 %v381
      %v414 = vunpack.c.l.b16 %v382
      %v415 = vunpack.c.l.b16 %v383
      %v416 = vunpack.c.l.b16 %v384
      %v417 = vunpack.c.l.b16 %v385
      %v418 = vunpack.c.l.b16 %v386
      %v419 = vunpack.c.l.b16 %v387
      %v420 = vunpack.c.l.b16 %v388
      %v421 = vunpack.c.l.b16 %v389
      %v422 = vunpack.c.l.b16 %v390
      %v423 = vpack.c.b16 %v408, %v407
      %v424 = vpack.c.b16 %v410, %v409
      %v425 = vpack.c.b16 %v412, %v411
      %v426 = vpack.c.b16 %v414, %v413
      %v427 = vpack.c.b16 %v416, %v415
      %v428 = vpack.c.b16 %v418, %v417
      %v429 = vpack.c.b16 %v420, %v419
      %v430 = vpack.c.b16 %v422, %v421
      %439 = vmatpush.bf16.msra.mxu0 %v430
      %440 = vmatpush.bf16.msra.mxu0 %v429
      %441 = vmatpush.bf16.msra.mxu0 %v428
      %442 = vmatpush.bf16.msra.mxu0 %v427
      %443 = vmatpush.bf16.msra.mxu0 %v426
      %444 = vmatpush.bf16.msra.mxu0 %v425
      %445 = vmatpush.bf16.msra.mxu0 %v424
      %446 = vmatpush.bf16.msra.mxu0 %v423
      %447 = vmatmul.bf16.gmra.mxu0 %v373
      %v448 = vpop.f32.mrf.mxu0
      %v449 = vadd.f32 0.0, %v448
      %v450 = vpop.f32.mrf.mxu0
      %v451 = vadd.f32 0.0, %v450
      %452 = vmatmul.bf16.gmra.mxu0 %v374
      %v453 = vpop.f32.mrf.mxu0
      %v454 = vadd.f32 0.0, %v453
      %v455 = vpop.f32.mrf.mxu0
      %v456 = vadd.f32 0.0, %v455
      %457 = vdwg.mxu0
      %v458 = vadd.f32 %v360, %v449
      %v459 = vadd.f32 %v361, %v451
      %v460 = vadd.f32 %v362, %v454
      %v461 = vadd.f32 %v363, %v456
      %462 = vst [vmem:[#allocation2] sm:$0xff] %v458
      %463 = vst [vmem:[#allocation2 + $0x8] sm:$0xff] %v459
      %464 = vst [vmem:[#allocation2 + $0x10] sm:$0xff] %v460
      %465 = vst [vmem:[#allocation2 + $0x18] sm:$0xff] %v461
      %p466 = scmp.eq.s32.totalorder %s24, 1
      // Predicated region
      $region57: #{gin_net_forward.3} parent=51 // pred_check
        %p467 = pneg %p466
      $region58: #{gin_net_forward.3} parent=51 // pred_check_branch
        %469 = sbr.rel (%p467) target = $region60
      $region59: #{gin_net_forward.3} parent=51 // pred_region
        %v470 = vld [vmem:[#allocation2] sm:$0xff]
        %v471 = vld [vmem:[#allocation2 + $0x8] sm:$0xff]
        %v472 = vld [vmem:[#allocation2 + $0x10] sm:$0xff]
        %v473 = vld [vmem:[#allocation2 + $0x18] sm:$0xff]
        %v474 = vpack.c.bf16 %v471, %v470
        %v475 = vpack.c.bf16 %v473, %v472
        %v476 = vld [vmem:[%s2] sm:$0xf]
        %v477 = vld [vmem:[%s2 + $0x4] sm:$0xf]
        %v478 = vld [vmem:[%s2 + $0x8] sm:$0xf]
        %v479 = vld [vmem:[%s2 + $0xc] sm:$0xf]
        %v480 = vld [vmem:[%s2 + $0x10] sm:$0xf]
        %v481 = vld [vmem:[%s2 + $0x14] sm:$0xf]
        %v482 = vld [vmem:[%s2 + $0x18] sm:$0xf]
        %v483 = vld [vmem:[%s2 + $0x1c] sm:$0xf]
        %v484 = vld [vmem:[%s2 + $0x20] sm:$0xf]
        %v485 = vld [vmem:[%s2 + $0x24] sm:$0xf]
        %v486 = vld [vmem:[%s2 + $0x28] sm:$0xf]
        %v487 = vld [vmem:[%s2 + $0x2c] sm:$0xf]
        %v488 = vld [vmem:[%s2 + $0x30] sm:$0xf]
        %v489 = vld [vmem:[%s2 + $0x34] sm:$0xf]
        %v490 = vld [vmem:[%s2 + $0x38] sm:$0xf]
        %v491 = vld [vmem:[%s2 + $0x3c] sm:$0xf]
        %v492 = vld [vmem:[%s3] sm:$0x1]
        %v494 = vperm.slane %v492, 0
        %v512 = vunpack.c.l.b16 %v476
        %v513 = vunpack.c.l.b16 %v477
        %v514 = vunpack.c.l.b16 %v478
        %v515 = vunpack.c.l.b16 %v479
        %v516 = vunpack.c.l.b16 %v480
        %v517 = vunpack.c.l.b16 %v481
        %v518 = vunpack.c.l.b16 %v482
        %v519 = vunpack.c.l.b16 %v483
        %v520 = vunpack.c.l.b16 %v484
        %v521 = vunpack.c.l.b16 %v485
        %v522 = vunpack.c.l.b16 %v486
        %v523 = vunpack.c.l.b16 %v487
        %v524 = vunpack.c.l.b16 %v488
        %v525 = vunpack.c.l.b16 %v489
        %v526 = vunpack.c.l.b16 %v490
        %v527 = vunpack.c.l.b16 %v491
        %v528 = vpack.c.b16 %v513, %v512
        %v529 = vpack.c.b16 %v515, %v514
        %v530 = vpack.c.b16 %v517, %v516
        %v531 = vpack.c.b16 %v519, %v518
        %v532 = vpack.c.b16 %v521, %v520
        %v533 = vpack.c.b16 %v523, %v522
        %v534 = vpack.c.b16 %v525, %v524
        %v535 = vpack.c.b16 %v527, %v526
        %544 = vmatpush.bf16.msra.mxu0 %v535
        %545 = vmatpush.bf16.msra.mxu0 %v534
        %546 = vmatpush.bf16.msra.mxu0 %v533
        %547 = vmatpush.bf16.msra.mxu0 %v532
        %548 = vmatpush.bf16.msra.mxu0 %v531
        %549 = vmatpush.bf16.msra.mxu0 %v530
        %550 = vmatpush.bf16.msra.mxu0 %v529
        %551 = vmatpush.bf16.msra.mxu0 %v528
        %552 = vmatmul.bf16.gmra.mxu0 %v474
        %v553 = vpop.f32.mrf.mxu0
        %v554 = vadd.f32 %v494, %v553
        %v555 = vpop.f32.mrf.mxu0
        %v556 = vadd.f32 %v494, %v555
        %557 = vmatmul.bf16.gmra.mxu0 %v475
        %v558 = vpop.f32.mrf.mxu0
        %v559 = vadd.f32 %v494, %v558
        %v560 = vpop.f32.mrf.mxu0
        %v561 = vadd.f32 %v494, %v560
        %562 = vdwg.mxu0
        %v563 = vmax.f32 %v554, 0.0
        %v564 = vmax.f32 %v556, 0.0
        %v565 = vmax.f32 %v559, 0.0
        %v566 = vmax.f32 %v561, 0.0
        %v567 = vpack.c.bf16 %v564, %v563
        %v568 = vpack.c.bf16 %v566, %v565
        %v569 = vld [vmem:[%s4] sm:$0xf]
        %v570 = vld [vmem:[%s4 + $0x4] sm:$0xf]
        %v571 = vld [vmem:[%s4 + $0x8] sm:$0xf]
        %v572 = vld [vmem:[%s4 + $0xc] sm:$0xf]
        %v573 = vld [vmem:[%s4 + $0x10] sm:$0xf]
        %v574 = vld [vmem:[%s4 + $0x14] sm:$0xf]
        %v575 = vld [vmem:[%s4 + $0x18] sm:$0xf]
        %v576 = vld [vmem:[%s4 + $0x1c] sm:$0xf]
        %v577 = vld [vmem:[%s4 + $0x20] sm:$0xf]
        %v578 = vld [vmem:[%s4 + $0x24] sm:$0xf]
        %v579 = vld [vmem:[%s4 + $0x28] sm:$0xf]
        %v580 = vld [vmem:[%s4 + $0x2c] sm:$0xf]
        %v581 = vld [vmem:[%s4 + $0x30] sm:$0xf]
        %v582 = vld [vmem:[%s4 + $0x34] sm:$0xf]
        %v583 = vld [vmem:[%s4 + $0x38] sm:$0xf]
        %v584 = vld [vmem:[%s4 + $0x3c] sm:$0xf]
        %v585 = vld [vmem:[%s5] sm:$0x1]
        %v587 = vperm.slane %v585, 0
        %v605 = vunpack.c.l.b16 %v569
        %v606 = vunpack.c.l.b16 %v570
        %v607 = vunpack.c.l.b16 %v571
        %v608 = vunpack.c.l.b16 %v572
        %v609 = vunpack.c.l.b16 %v573
        %v610 = vunpack.c.l.b16 %v574
        %v611 = vunpack.c.l.b16 %v575
        %v612 = vunpack.c.l.b16 %v576
        %v613 = vunpack.c.l.b16 %v577
        %v614 = vunpack.c.l.b16 %v578
        %v615 = vunpack.c.l.b16 %v579
        %v616 = vunpack.c.l.b16 %v580
        %v617 = vunpack.c.l.b16 %v581
        %v618 = vunpack.c.l.b16 %v582
        %v619 = vunpack.c.l.b16 %v583
        %v620 = vunpack.c.l.b16 %v584
        %v621 = vpack.c.b16 %v606, %v605
        %v622 = vpack.c.b16 %v608, %v607
        %v623 = vpack.c.b16 %v610, %v609
        %v624 = vpack.c.b16 %v612, %v611
        %v625 = vpack.c.b16 %v614, %v613
        %v626 = vpack.c.b16 %v616, %v615
        %v627 = vpack.c.b16 %v618, %v617
        %v628 = vpack.c.b16 %v620, %v619
        %637 = vmatpush.bf16.msra.mxu0 %v628
        %638 = vmatpush.bf16.msra.mxu0 %v627
        %639 = vmatpush.bf16.msra.mxu0 %v626
        %640 = vmatpush.bf16.msra.mxu0 %v625
        %641 = vmatpush.bf16.msra.mxu0 %v624
        %642 = vmatpush.bf16.msra.mxu0 %v623
        %643 = vmatpush.bf16.msra.mxu0 %v622
        %644 = vmatpush.bf16.msra.mxu0 %v621
        %645 = vmatmul.bf16.gmra.mxu0 %v567
        %v646 = vpop.f32.mrf.mxu0
        %v647 = vadd.f32 %v587, %v646
        %v648 = vpop.f32.mrf.mxu0
        %v649 = vadd.f32 %v587, %v648
        %650 = vmatmul.bf16.gmra.mxu0 %v568
        %v651 = vpop.f32.mrf.mxu0
        %v652 = vadd.f32 %v587, %v651
        %v653 = vpop.f32.mrf.mxu0
        %v654 = vadd.f32 %v587, %v653
        %655 = vdwg.mxu0
        %v656 = vmax.f32 %v647, 0.0
        %v657 = vmax.f32 %v649, 0.0
        %v658 = vmax.f32 %v652, 0.0
        %v659 = vmax.f32 %v654, 0.0
        %v660 = vpack.c.bf16 %v657, %v656
        %v661 = vpack.c.bf16 %v659, %v658
        %v662 = vld [vmem:[%s6] sm:$0xf]
        %v663 = vld [vmem:[%s6 + $0x4] sm:$0xf]
        %v664 = vld [vmem:[%s6 + $0x8] sm:$0xf]
        %v665 = vld [vmem:[%s6 + $0xc] sm:$0xf]
        %v666 = vld [vmem:[%s6 + $0x10] sm:$0xf]
        %v667 = vld [vmem:[%s6 + $0x14] sm:$0xf]
        %v668 = vld [vmem:[%s6 + $0x18] sm:$0xf]
        %v669 = vld [vmem:[%s6 + $0x1c] sm:$0xf]
        %v670 = vld [vmem:[%s6 + $0x20] sm:$0xf]
        %v671 = vld [vmem:[%s6 + $0x24] sm:$0xf]
        %v672 = vld [vmem:[%s6 + $0x28] sm:$0xf]
        %v673 = vld [vmem:[%s6 + $0x2c] sm:$0xf]
        %v674 = vld [vmem:[%s6 + $0x30] sm:$0xf]
        %v675 = vld [vmem:[%s6 + $0x34] sm:$0xf]
        %v676 = vld [vmem:[%s6 + $0x38] sm:$0xf]
        %v677 = vld [vmem:[%s6 + $0x3c] sm:$0xf]
        %v678 = vld [vmem:[%s7] sm:$0x1]
        %v680 = vperm.slane %v678, 0
        %v698 = vunpack.c.l.b16 %v662
        %v699 = vunpack.c.l.b16 %v663
        %v700 = vunpack.c.l.b16 %v664
        %v701 = vunpack.c.l.b16 %v665
        %v702 = vunpack.c.l.b16 %v666
        %v703 = vunpack.c.l.b16 %v667
        %v704 = vunpack.c.l.b16 %v668
        %v705 = vunpack.c.l.b16 %v669
        %v706 = vunpack.c.l.b16 %v670
        %v707 = vunpack.c.l.b16 %v671
        %v708 = vunpack.c.l.b16 %v672
        %v709 = vunpack.c.l.b16 %v673
        %v710 = vunpack.c.l.b16 %v674
        %v711 = vunpack.c.l.b16 %v675
        %v712 = vunpack.c.l.b16 %v676
        %v713 = vunpack.c.l.b16 %v677
        %v714 = vpack.c.b16 %v699, %v698
        %v715 = vpack.c.b16 %v701, %v700
        %v716 = vpack.c.b16 %v703, %v702
        %v717 = vpack.c.b16 %v705, %v704
        %v718 = vpack.c.b16 %v707, %v706
        %v719 = vpack.c.b16 %v709, %v708
        %v720 = vpack.c.b16 %v711, %v710
        %v721 = vpack.c.b16 %v713, %v712
        %730 = vmatpush.bf16.msra.mxu0 %v721
        %731 = vmatpush.bf16.msra.mxu0 %v720
        %732 = vmatpush.bf16.msra.mxu0 %v719
        %733 = vmatpush.bf16.msra.mxu0 %v718
        %734 = vmatpush.bf16.msra.mxu0 %v717
        %735 = vmatpush.bf16.msra.mxu0 %v716
        %736 = vmatpush.bf16.msra.mxu0 %v715
        %737 = vmatpush.bf16.msra.mxu0 %v714
        %738 = vmatmul.bf16.gmra.mxu0 %v660
        %v739 = vpop.f32.mrf.mxu0
        %v740 = vadd.f32 %v680, %v739
        %v741 = vpop.f32.mrf.mxu0
        %v742 = vadd.f32 %v680, %v741
        %743 = vmatmul.bf16.gmra.mxu0 %v661
        %v744 = vpop.f32.mrf.mxu0
        %v745 = vadd.f32 %v680, %v744
        %v746 = vpop.f32.mrf.mxu0
        %v747 = vadd.f32 %v680, %v746
        %748 = vdwg.mxu0
        %v749 = vmax.f32 %v740, 0.0
        %v750 = vmax.f32 %v742, 0.0
        %v751 = vmax.f32 %v745, 0.0
        %v752 = vmax.f32 %v747, 0.0
        %753 = vst [vmem:[%s350] sm:$0xff] %v749
        %754 = vst [vmem:[%s350 + $0x8] sm:$0xff] %v750
        %755 = vst [vmem:[%s350 + $0x10] sm:$0xff] %v751
        %756 = vst [vmem:[%s350 + $0x18] sm:$0xff] %v752
      $region60: #{gin_net_forward.3} parent=51 // pred_fallthru
        _
      %s757 = smul.u32 4, %s23
      %p758 = scmp.lt.s32.totalorder %s757, 31
      %s759 = scalar_select %p758, %s757, 31
      %s760 = smul.addr %s759, 8
      %s761 = scalar_lea.vmem %s8, %s760
      // Predicated region
      $region61: #{gin_net_forward.3} parent=51 // pred_check
        %p762 = pneg %p229
      $region62: #{gin_net_forward.3} parent=51 // pred_check_branch
        %764 = sbr.rel (%p762) target = $region64
      $region63: #{gin_net_forward.3} parent=51 // pred_region
        %s765 = smul.u32 4, %s23
      $region64: #{gin_net_forward.3} parent=51 // pred_fallthru
        _
    $region52: #{gin_net_forward.3} parent=5 // pred_fallthru
      _
    %p766 = scmp.le.s32.totalorder 2, %s14
    // Predicated region
    $region65: #{gin_net_forward.3} parent=5 // pred_check
      %p767 = pneg %p766
    $region66: #{gin_net_forward.3} parent=5 // pred_check_branch
      %769 = sbr.rel (%p767) target = $region68
    $region67: #{gin_net_forward.3} parent=5 // pred_region
      %s770 = ssub.s32 %s14, 2
      // Predicated region
      $region69: #{gin_net_forward.3} parent=67 // pred_check
        %p771 = pneg %p235
      $region70: #{gin_net_forward.3} parent=67 // pred_check_branch
        %773 = sbr.rel (%p771) target = $region72
      $region71: #{gin_net_forward.3} parent=67 // pred_region
        %s774 = smul.u32 4, %s25
        %p775 = scmp.lt.s32.totalorder %s774, 31
        %s776 = scalar_select %p775, %s774, 31
        %s777 = smul.addr %s776, 8
        %s778 = scalar_lea.vmem %s8, %s777
      $region72: #{gin_net_forward.3} parent=67 // pred_fallthru
        _
    $region68: #{gin_net_forward.3} parent=5 // pred_fallthru
      _
  $region6: #{gin_net_forward.3} parent=0 // loop_footer
    %s18 = sadd.s32 1, %s14
  $region7: #{gin_net_forward.3} parent=0 // loop_footer_branch
    %13 = sbr.rel target = $region3
  $region8: #{gin_net_forward.3} parent=0 // loop_exit
    _

</llo_original>
